<compile_context>
chip_gen: v7x
topology: tpu7x:2x2x1
jax: 0.10.0
libtpu: 0.0.40
codegen_flags: <defaults>
</compile_context>

<pallas_src>
import functools
import math

import jax
import jax.numpy as jnp
from jax import lax
from jax.experimental import pallas as pl
from jax.experimental.pallas import tpu as pltpu


def _single_pass_kernel(H, D, scale, mm_dtype):
    """n_kv == 1: whole K/V sequence is one tile -> plain softmax, no recurrence."""

    def kernel(q_ref, k_ref, v_ref, o_ref):
        # q_ref: (1, tq, H*D)   k_ref/v_ref: (1, S, H*D)   o_ref: (1, tq, H*D)
        q = (q_ref[0] * scale).astype(mm_dtype)  # scale folded once into q
        for h in range(H):  # H is small and static; unrolled
            lo, hi = h * D, (h + 1) * D
            qh = q[:, lo:hi]                          # (tq, D)
            kh = k_ref[0, :, lo:hi].astype(mm_dtype)  # (S, D)
            vh = v_ref[0, :, lo:hi].astype(mm_dtype)  # (S, D)
            # Contract last dims of both operands -> no explicit k transpose.
            s = lax.dot_general(
                qh, kh,
                dimension_numbers=(((1,), (1,)), ((), ())),
                preferred_element_type=jnp.float32,
            )                                          # (tq, S)
            m = s.max(axis=-1, keepdims=True)
            p = jnp.exp(s - m)
            l = p.sum(axis=-1, keepdims=True)
            oh = jnp.dot(p.astype(mm_dtype), vh, preferred_element_type=jnp.float32)
            o_ref[0, :, lo:hi] = (oh * pl.reciprocal(l, approx=True)).astype(o_ref.dtype)

    return kernel


def _online_softmax_kernel(H, D, S, tk, scale, mm_dtype, mask_kv_tail):
    """General path: kv tiled along the innermost 'arbitrary' grid axis."""

    def kernel(q_ref, k_ref, v_ref, o_ref, qs_sc, m_sc, l_sc, acc_sc):
        # q_ref: (1, tq, H*D)   k_ref/v_ref: (1, tk, H*D)   o_ref: (1, tq, H*D)
        # qs_sc: (tq, H*D) mm_dtype (scaled, pre-cast q — written once per q tile)
        # m_sc/l_sc: (H, tq, 1) f32     acc_sc: (H, tq, D) f32
        ki = pl.program_id(2)
        last = pl.num_programs(2) - 1

        @pl.when(ki == 0)
        def _():
            # Hoisted out of the per-kv-step path: one full-width multiply per q tile.
            qs_sc[...] = (q_ref[0] * scale).astype(qs_sc.dtype)
            m_sc[...] = jnp.full_like(m_sc, -jnp.inf)
            l_sc[...] = jnp.zeros_like(l_sc)
            acc_sc[...] = jnp.zeros_like(acc_sc)

        def step(masked):
            if masked:
                col_ok = (
                    lax.broadcasted_iota(jnp.int32, (1, tk), 1) + ki * tk
                ) < S  # (1, tk)
            for h in range(H):  # H is small and static; unrolled
                lo, hi = h * D, (h + 1) * D
                qh = qs_sc[:, lo:hi]                      # (tq, D) already scaled/cast
                kh = k_ref[0, :, lo:hi].astype(mm_dtype)  # (tk, D)
                vh = v_ref[0, :, lo:hi].astype(mm_dtype)  # (tk, D)
                s = lax.dot_general(
                    qh, kh,
                    dimension_numbers=(((1,), (1,)), ((), ())),
                    preferred_element_type=jnp.float32,
                )                                          # (tq, tk)
                if masked:
                    # Large finite negative (not -inf): keeps alpha = exp(m_prev - m_new)
                    # NaN-free even if a whole row of this tile were masked.
                    s = jnp.where(col_ok, s, -1e30)
                m_prev = m_sc[h]                           # (tq, 1)
                m_new = jnp.maximum(m_prev, s.max(axis=-1, keepdims=True))
                alpha = jnp.exp(m_prev - m_new)
                p = jnp.exp(s - m_new)
                l_sc[h] = alpha * l_sc[h] + p.sum(axis=-1, keepdims=True)
                acc_sc[h] = alpha * acc_sc[h] + jnp.dot(
                    p.astype(mm_dtype), vh, preferred_element_type=jnp.float32
                )
                m_sc[h] = m_new

        if mask_kv_tail:
            # Pay the (tq, tk) mask selects only on the final (ragged) kv tile.
            @pl.when(ki == last)
            def _():
                step(True)

            @pl.when(ki != last)
            def _():
                step(False)
        else:
            step(False)

        @pl.when(ki == last)
        def _():
            for h in range(H):
                lo, hi = h * D, (h + 1) * D
                o_ref[0, :, lo:hi] = (
                    acc_sc[h] * pl.reciprocal(l_sc[h], approx=True)
                ).astype(o_ref.dtype)

    return kernel


def _default_tk():
    # tk is the MXU N dim of QK^T: 128 already fills v5e's 128-wide MXU; 256 for v6e/v7x.
    try:
        kind = jax.devices()[0].device_kind.lower()
    except Exception:
        kind = ""
    return 128 if "v5" in kind else 256


@functools.partial(jax.jit, static_argnames=("tq", "tk", "use_bf16_matmul"))
def minimal_a2a_attn_op(query, key, value, *, tq=None, tk=None, use_bf16_matmul=True):
    """Forward of MinimalA2AAttnOp on a single device (pg is None path).

    query/key/value: (B, S, H, D).  Returns (B, S, H*D).
    """
    B, S, H, D = query.shape
    HD = H * D
    scale = 1.0 / math.sqrt(D)
    mm_dtype = jnp.bfloat16 if use_bf16_matmul else jnp.float32

    # Free contiguous-dim merges (no HBM pass): (B,S,H,D) -> (B,S,H*D), lane-dense.
    q2 = query.reshape(B, S, HD)
    k2 = key.reshape(B, S, HD)
    v2 = value.reshape(B, S, HD)

    # --- tile selection -------------------------------------------------------
    if tq is None:
        tq = 512
    if tk is None:
        tk = _default_tk()
        # Fast path: whole K+V sequence comfortably in VMEM -> collapse the kv grid.
        kv_bytes = 2 * S * HD * query.dtype.itemsize
        if kv_bytes <= 4 * 1024 * 1024:
            tk = S
    tq = min(tq, S)
    tk = min(tk, S)

    # v7x has 2 TensorCores sharing the 'parallel' grid axes: keep >= 2 parallel items.
    if B * pl.cdiv(S, tq) < 2 and S > 8:
        tq = max(8, pl.cdiv(pl.cdiv(S, 2), 8) * 8)

    n_q = pl.cdiv(S, tq)
    n_kv = pl.cdiv(S, tk)
    mask_kv_tail = (S % tk) != 0
    out_shape = jax.ShapeDtypeStruct((B, S, HD), query.dtype)

    if n_kv == 1:
        kernel = _single_pass_kernel(H, D, scale, mm_dtype)
        return pl.pallas_call(
            kernel,
            out_shape=out_shape,
            grid_spec=pltpu.PrefetchScalarGridSpec(
                num_scalar_prefetch=0,
                grid=(B, n_q),
                in_specs=[
                    pl.BlockSpec((1, tq, HD), lambda b, qi: (b, qi, 0)),  # q tile
                    pl.BlockSpec((1, tk, HD), lambda b, qi: (b, 0, 0)),   # full K
                    pl.BlockSpec((1, tk, HD), lambda b, qi: (b, 0, 0)),   # full V
                ],
                out_specs=pl.BlockSpec((1, tq, HD), lambda b, qi: (b, qi, 0)),
            ),
            compiler_params=pltpu.CompilerParams(
                dimension_semantics=("parallel", "parallel"),
            ),
        )(q2, k2, v2)

    kernel = _online_softmax_kernel(H, D, S, tk, scale, mm_dtype, mask_kv_tail)
    return pl.pallas_call(
        kernel,
        out_shape=out_shape,
        grid_spec=pltpu.PrefetchScalarGridSpec(
            num_scalar_prefetch=0,
            grid=(B, n_q, n_kv),  # kv innermost ('arbitrary') carries the online softmax
            in_specs=[
                pl.BlockSpec((1, tq, HD), lambda b, qi, ki: (b, qi, 0)),  # q tile
                pl.BlockSpec((1, tk, HD), lambda b, qi, ki: (b, ki, 0)),  # k tile
                pl.BlockSpec((1, tk, HD), lambda b, qi, ki: (b, ki, 0)),  # v tile
            ],
            out_specs=pl.BlockSpec((1, tq, HD), lambda b, qi, ki: (b, qi, 0)),
            scratch_shapes=[
                pltpu.VMEM((tq, HD), mm_dtype),       # scaled + pre-cast q tile
                pltpu.VMEM((H, tq, 1), jnp.float32),  # running max m_i (per head)
                pltpu.VMEM((H, tq, 1), jnp.float32),  # running sum l_i (per head)
                pltpu.VMEM((H, tq, D), jnp.float32),  # output accumulator (per head)
            ],
        ),
        compiler_params=pltpu.CompilerParams(
            dimension_semantics=("parallel", "parallel", "arbitrary"),
        ),
    )(q2, k2, v2)


def _reference(query, key, value):
    """Plain-JAX f32 reference (same math as torch SDPA, non-causal) + (h d) merge."""
    B, S, H, D = query.shape
    scale = 1.0 / math.sqrt(D)
    q = jnp.transpose(query, (0, 2, 1, 3))  # (B,H,S,D)
    k = jnp.transpose(key, (0, 2, 1, 3))
    v = jnp.transpose(value, (0, 2, 1, 3))
    s = jnp.einsum("bhqd,bhkd->bhqk", q, k) * scale
    p = jax.nn.softmax(s, axis=-1)
    o = jnp.einsum("bhqk,bhkd->bhqd", p, v)
    return jnp.transpose(o, (0, 2, 1, 3)).reshape(B, S, H * D)


if __name__ == "__main__":
    root = jax.random.PRNGKey(0)
    k1, k2_, k3, k4, k5, k6 = jax.random.split(root, 6)

    # Case 1: small sequence -> single-pass fast path, bf16 MXU operands (default).
    B, S, H, D = 2, 128, 4, 32
    q = jax.random.normal(k1, (B, S, H, D), dtype=jnp.float32)
    k = jax.random.normal(k2_, (B, S, H, D), dtype=jnp.float32)
    v = jax.random.normal(k3, (B, S, H, D), dtype=jnp.float32)
    out = minimal_a2a_attn_op(q, k, v)
    jax.block_until_ready(out)
    ref = _reference(q, k, v)
    assert out.shape == (B, S, H * D), out.shape
    err = float(jnp.max(jnp.abs(out - ref)))
    # bf16 matmul operands + approx reciprocal vs f32 reference
    assert err < 7e-2, err

    # Case 2: longer sequence, explicit small tiles -> online-softmax path with a
    # ragged (masked) last KV tile; f32 matmuls for a tight numerical check.
    B2, S2 = 2, 320
    q2 = jax.random.normal(k4, (B2, S2, H, D), dtype=jnp.float32)
    k2 = jax.random.normal(k5, (B2, S2, H, D), dtype=jnp.float32)
    v2 = jax.random.normal(k6, (B2, S2, H, D), dtype=jnp.float32)
    out2 = minimal_a2a_attn_op(q2, k2, v2, tq=128, tk=128, use_bf16_matmul=False)
    jax.block_until_ready(out2)
    ref2 = _reference(q2, k2, v2)
    assert out2.shape == (B2, S2, H * D), out2.shape
    err2 = float(jnp.max(jnp.abs(out2 - ref2)))
    # only the approx reciprocal differs from exact f32 math
    assert err2 < 5e-3, err2

    print("KERNEL_OK")
</pallas_src>

<mosaic_0001>
module attributes {stable_mosaic.version = 11 : i64} {
  func.func @kernel(%arg0: i32, %arg1: i32, %arg2: memref<1x128x128xf32, #tpu.memory_space<vmem>>, %arg3: memref<1x128x128xf32, #tpu.memory_space<vmem>>, %arg4: memref<1x128x128xf32, #tpu.memory_space<vmem>>, %arg5: memref<1x128x128xf32, #tpu.memory_space<vmem>>) attributes {dimension_semantics = [#tpu.dimension_semantics<parallel>, #tpu.dimension_semantics<parallel>], iteration_bounds = array<i64: 2, 1>, scalar_prefetch = 0 : i64, scratch_operands = 0 : i64, tpu.core_type = #tpu.core_type<tc>, window_params = [{transform_indices = @transform_0, window_bounds = array<i64: 1, 128, 128>}, {transform_indices = @transform_1, window_bounds = array<i64: 1, 128, 128>}, {transform_indices = @transform_2, window_bounds = array<i64: 1, 128, 128>}, {transform_indices = @transform_3, window_bounds = array<i64: 1, 128, 128>}]} {
    %c0 = arith.constant 0 : index
    %c0_0 = arith.constant 0 : index
    %c0_1 = arith.constant 0 : index
    %0 = vector.load %arg2[%c0, %c0_0, %c0_1] : memref<1x128x128xf32, #tpu.memory_space<vmem>>, vector<1x128x128xf32>
    %1 = vector.shape_cast %0 : vector<1x128x128xf32> to vector<128x128xf32>
    %cst = arith.constant 0.176776692 : f32
    %2 = vector.broadcast %cst : f32 to vector<128x128xf32>
    %3 = arith.mulf %1, %2 : vector<128x128xf32>
    %4 = arith.truncf %3 : vector<128x128xf32> to vector<128x128xbf16>
    %5 = vector.extract_strided_slice %4 {offsets = [0, 0], sizes = [128, 32], strides = [1, 1]} : vector<128x128xbf16> to vector<128x32xbf16>
    %c0_2 = arith.constant 0 : index
    %c0_3 = arith.constant 0 : index
    %c0_4 = arith.constant 0 : index
    %6 = vector.load %arg3[%c0_2, %c0_3, %c0_4] : memref<1x128x128xf32, #tpu.memory_space<vmem>>, vector<1x128x32xf32>
    %7 = vector.shape_cast %6 : vector<1x128x32xf32> to vector<128x32xf32>
    %8 = arith.truncf %7 : vector<128x32xf32> to vector<128x32xbf16>
    %c0_5 = arith.constant 0 : index
    %c0_6 = arith.constant 0 : index
    %c0_7 = arith.constant 0 : index
    %9 = vector.load %arg4[%c0_5, %c0_6, %c0_7] : memref<1x128x128xf32, #tpu.memory_space<vmem>>, vector<1x128x32xf32>
    %10 = vector.shape_cast %9 : vector<1x128x32xf32> to vector<128x32xf32>
    %11 = arith.truncf %10 : vector<128x32xf32> to vector<128x32xbf16>
    %cst_8 = arith.constant dense<0.000000e+00> : vector<128x128xf32>
    %12 = tpu.matmul %5, %8, %cst_8 {dimension_numbers = #tpu.dot_dimension_numbers<[1], [1], [0], [0], [0, 0, 1, 0], [], []>} : vector<128x32xbf16>, vector<128x32xbf16>, vector<128x128xf32> -> vector<128x128xf32>
    %cst_9 = arith.constant dense<0xFF800000> : vector<128xf32>
    %13 = vector.multi_reduction <maximumf>, %12, %cst_9 [1] : vector<128x128xf32> to vector<128xf32>
    %14 = vector.shape_cast %13 : vector<128xf32> to vector<128x1xf32>
    %15 = vector.broadcast %14 : vector<128x1xf32> to vector<128x128xf32>
    %16 = arith.subf %12, %15 : vector<128x128xf32>
    %17 = math.exp %16 : vector<128x128xf32>
    %cst_10 = arith.constant dense<0.000000e+00> : vector<128xf32>
    %18 = vector.multi_reduction <add>, %17, %cst_10 [1] : vector<128x128xf32> to vector<128xf32>
    %19 = vector.shape_cast %18 : vector<128xf32> to vector<128x1xf32>
    %20 = arith.truncf %17 : vector<128x128xf32> to vector<128x128xbf16>
    %cst_11 = arith.constant dense<0.000000e+00> : vector<128x32xf32>
    %21 = tpu.matmul %20, %11, %cst_11 {dimension_numbers = #tpu.dot_dimension_numbers<[1], [0], [0], [1], [0, 0, 1, 1], [], []>} : vector<128x128xbf16>, vector<128x32xbf16>, vector<128x32xf32> -> vector<128x32xf32>
    %22 = tpu.reciprocal %19 {approx = true} : vector<128x1xf32> -> vector<128x1xf32>
    %23 = vector.broadcast %22 : vector<128x1xf32> to vector<128x32xf32>
    %24 = arith.mulf %21, %23 : vector<128x32xf32>
    %c0_12 = arith.constant 0 : index
    %c0_13 = arith.constant 0 : index
    %c0_14 = arith.constant 0 : index
    %25 = vector.load %arg5[%c0_12, %c0_13, %c0_14] : memref<1x128x128xf32, #tpu.memory_space<vmem>>, vector<1x128x32xf32>
    %26 = vector.shape_cast %25 : vector<1x128x32xf32> to vector<128x32xf32>
    %27 = vector.shape_cast %24 : vector<128x32xf32> to vector<1x128x32xf32>
    tpu.vector_store %arg5[%c0_12, %c0_13, %c0_14], %27 {strides = array<i32>} : memref<1x128x128xf32, #tpu.memory_space<vmem>>, vector<1x128x32xf32>,
    %28 = vector.extract_strided_slice %4 {offsets = [0, 32], sizes = [128, 32], strides = [1, 1]} : vector<128x128xbf16> to vector<128x32xbf16>
    %c0_15 = arith.constant 0 : index
    %c0_16 = arith.constant 0 : index
    %c32 = arith.constant 32 : index
    %29 = vector.load %arg3[%c0_15, %c0_16, %c32] : memref<1x128x128xf32, #tpu.memory_space<vmem>>, vector<1x128x32xf32>
    %30 = vector.shape_cast %29 : vector<1x128x32xf32> to vector<128x32xf32>
    %31 = arith.truncf %30 : vector<128x32xf32> to vector<128x32xbf16>
    %c0_17 = arith.constant 0 : index
    %c0_18 = arith.constant 0 : index
    %c32_19 = arith.constant 32 : index
    %32 = vector.load %arg4[%c0_17, %c0_18, %c32_19] : memref<1x128x128xf32, #tpu.memory_space<vmem>>, vector<1x128x32xf32>
    %33 = vector.shape_cast %32 : vector<1x128x32xf32> to vector<128x32xf32>
    %34 = arith.truncf %33 : vector<128x32xf32> to vector<128x32xbf16>
    %cst_20 = arith.constant dense<0.000000e+00> : vector<128x128xf32>
    %35 = tpu.matmul %28, %31, %cst_20 {dimension_numbers = #tpu.dot_dimension_numbers<[1], [1], [0], [0], [0, 0, 1, 0], [], []>} : vector<128x32xbf16>, vector<128x32xbf16>, vector<128x128xf32> -> vector<128x128xf32>
    %cst_21 = arith.constant dense<0xFF800000> : vector<128xf32>
    %36 = vector.multi_reduction <maximumf>, %35, %cst_21 [1] : vector<128x128xf32> to vector<128xf32>
    %37 = vector.shape_cast %36 : vector<128xf32> to vector<128x1xf32>
    %38 = vector.broadcast %37 : vector<128x1xf32> to vector<128x128xf32>
    %39 = arith.subf %35, %38 : vector<128x128xf32>
    %40 = math.exp %39 : vector<128x128xf32>
    %cst_22 = arith.constant dense<0.000000e+00> : vector<128xf32>
    %41 = vector.multi_reduction <add>, %40, %cst_22 [1] : vector<128x128xf32> to vector<128xf32>
    %42 = vector.shape_cast %41 : vector<128xf32> to vector<128x1xf32>
    %43 = arith.truncf %40 : vector<128x128xf32> to vector<128x128xbf16>
    %cst_23 = arith.constant dense<0.000000e+00> : vector<128x32xf32>
    %44 = tpu.matmul %43, %34, %cst_23 {dimension_numbers = #tpu.dot_dimension_numbers<[1], [0], [0], [1], [0, 0, 1, 1], [], []>} : vector<128x128xbf16>, vector<128x32xbf16>, vector<128x32xf32> -> vector<128x32xf32>
    %45 = tpu.reciprocal %42 {approx = true} : vector<128x1xf32> -> vector<128x1xf32>
    %46 = vector.broadcast %45 : vector<128x1xf32> to vector<128x32xf32>
    %47 = arith.mulf %44, %46 : vector<128x32xf32>
    %c0_24 = arith.constant 0 : index
    %c0_25 = arith.constant 0 : index
    %c32_26 = arith.constant 32 : index
    %48 = vector.load %arg5[%c0_24, %c0_25, %c32_26] : memref<1x128x128xf32, #tpu.memory_space<vmem>>, vector<1x128x32xf32>
    %49 = vector.shape_cast %48 : vector<1x128x32xf32> to vector<128x32xf32>
    %50 = vector.shape_cast %47 : vector<128x32xf32> to vector<1x128x32xf32>
    tpu.vector_store %arg5[%c0_24, %c0_25, %c32_26], %50 {strides = array<i32>} : memref<1x128x128xf32, #tpu.memory_space<vmem>>, vector<1x128x32xf32>,
    %51 = vector.extract_strided_slice %4 {offsets = [0, 64], sizes = [128, 32], strides = [1, 1]} : vector<128x128xbf16> to vector<128x32xbf16>
    %c0_27 = arith.constant 0 : index
    %c0_28 = arith.constant 0 : index
    %c64 = arith.constant 64 : index
    %52 = vector.load %arg3[%c0_27, %c0_28, %c64] : memref<1x128x128xf32, #tpu.memory_space<vmem>>, vector<1x128x32xf32>
    %53 = vector.shape_cast %52 : vector<1x128x32xf32> to vector<128x32xf32>
    %54 = arith.truncf %53 : vector<128x32xf32> to vector<128x32xbf16>
    %c0_29 = arith.constant 0 : index
    %c0_30 = arith.constant 0 : index
    %c64_31 = arith.constant 64 : index
    %55 = vector.load %arg4[%c0_29, %c0_30, %c64_31] : memref<1x128x128xf32, #tpu.memory_space<vmem>>, vector<1x128x32xf32>
    %56 = vector.shape_cast %55 : vector<1x128x32xf32> to vector<128x32xf32>
    %57 = arith.truncf %56 : vector<128x32xf32> to vector<128x32xbf16>
    %cst_32 = arith.constant dense<0.000000e+00> : vector<128x128xf32>
    %58 = tpu.matmul %51, %54, %cst_32 {dimension_numbers = #tpu.dot_dimension_numbers<[1], [1], [0], [0], [0, 0, 1, 0], [], []>} : vector<128x32xbf16>, vector<128x32xbf16>, vector<128x128xf32> -> vector<128x128xf32>
    %cst_33 = arith.constant dense<0xFF800000> : vector<128xf32>
    %59 = vector.multi_reduction <maximumf>, %58, %cst_33 [1] : vector<128x128xf32> to vector<128xf32>
    %60 = vector.shape_cast %59 : vector<128xf32> to vector<128x1xf32>
    %61 = vector.broadcast %60 : vector<128x1xf32> to vector<128x128xf32>
    %62 = arith.subf %58, %61 : vector<128x128xf32>
    %63 = math.exp %62 : vector<128x128xf32>
    %cst_34 = arith.constant dense<0.000000e+00> : vector<128xf32>
    %64 = vector.multi_reduction <add>, %63, %cst_34 [1] : vector<128x128xf32> to vector<128xf32>
    %65 = vector.shape_cast %64 : vector<128xf32> to vector<128x1xf32>
    %66 = arith.truncf %63 : vector<128x128xf32> to vector<128x128xbf16>
    %cst_35 = arith.constant dense<0.000000e+00> : vector<128x32xf32>
    %67 = tpu.matmul %66, %57, %cst_35 {dimension_numbers = #tpu.dot_dimension_numbers<[1], [0], [0], [1], [0, 0, 1, 1], [], []>} : vector<128x128xbf16>, vector<128x32xbf16>, vector<128x32xf32> -> vector<128x32xf32>
    %68 = tpu.reciprocal %65 {approx = true} : vector<128x1xf32> -> vector<128x1xf32>
    %69 = vector.broadcast %68 : vector<128x1xf32> to vector<128x32xf32>
    %70 = arith.mulf %67, %69 : vector<128x32xf32>
    %c0_36 = arith.constant 0 : index
    %c0_37 = arith.constant 0 : index
    %c64_38 = arith.constant 64 : index
    %71 = vector.load %arg5[%c0_36, %c0_37, %c64_38] : memref<1x128x128xf32, #tpu.memory_space<vmem>>, vector<1x128x32xf32>
    %72 = vector.shape_cast %71 : vector<1x128x32xf32> to vector<128x32xf32>
    %73 = vector.shape_cast %70 : vector<128x32xf32> to vector<1x128x32xf32>
    tpu.vector_store %arg5[%c0_36, %c0_37, %c64_38], %73 {strides = array<i32>} : memref<1x128x128xf32, #tpu.memory_space<vmem>>, vector<1x128x32xf32>,
    %74 = vector.extract_strided_slice %4 {offsets = [0, 96], sizes = [128, 32], strides = [1, 1]} : vector<128x128xbf16> to vector<128x32xbf16>
    %c0_39 = arith.constant 0 : index
    %c0_40 = arith.constant 0 : index
    %c96 = arith.constant 96 : index
    %75 = vector.load %arg3[%c0_39, %c0_40, %c96] : memref<1x128x128xf32, #tpu.memory_space<vmem>>, vector<1x128x32xf32>
    %76 = vector.shape_cast %75 : vector<1x128x32xf32> to vector<128x32xf32>
    %77 = arith.truncf %76 : vector<128x32xf32> to vector<128x32xbf16>
    %c0_41 = arith.constant 0 : index
    %c0_42 = arith.constant 0 : index
    %c96_43 = arith.constant 96 : index
    %78 = vector.load %arg4[%c0_41, %c0_42, %c96_43] : memref<1x128x128xf32, #tpu.memory_space<vmem>>, vector<1x128x32xf32>
    %79 = vector.shape_cast %78 : vector<1x128x32xf32> to vector<128x32xf32>
    %80 = arith.truncf %79 : vector<128x32xf32> to vector<128x32xbf16>
    %cst_44 = arith.constant dense<0.000000e+00> : vector<128x128xf32>
    %81 = tpu.matmul %74, %77, %cst_44 {dimension_numbers = #tpu.dot_dimension_numbers<[1], [1], [0], [0], [0, 0, 1, 0], [], []>} : vector<128x32xbf16>, vector<128x32xbf16>, vector<128x128xf32> -> vector<128x128xf32>
    %cst_45 = arith.constant dense<0xFF800000> : vector<128xf32>
    %82 = vector.multi_reduction <maximumf>, %81, %cst_45 [1] : vector<128x128xf32> to vector<128xf32>
    %83 = vector.shape_cast %82 : vector<128xf32> to vector<128x1xf32>
    %84 = vector.broadcast %83 : vector<128x1xf32> to vector<128x128xf32>
    %85 = arith.subf %81, %84 : vector<128x128xf32>
    %86 = math.exp %85 : vector<128x128xf32>
    %cst_46 = arith.constant dense<0.000000e+00> : vector<128xf32>
    %87 = vector.multi_reduction <add>, %86, %cst_46 [1] : vector<128x128xf32> to vector<128xf32>
    %88 = vector.shape_cast %87 : vector<128xf32> to vector<128x1xf32>
    %89 = arith.truncf %86 : vector<128x128xf32> to vector<128x128xbf16>
    %cst_47 = arith.constant dense<0.000000e+00> : vector<128x32xf32>
    %90 = tpu.matmul %89, %80, %cst_47 {dimension_numbers = #tpu.dot_dimension_numbers<[1], [0], [0], [1], [0, 0, 1, 1], [], []>} : vector<128x128xbf16>, vector<128x32xbf16>, vector<128x32xf32> -> vector<128x32xf32>
    %91 = tpu.reciprocal %88 {approx = true} : vector<128x1xf32> -> vector<128x1xf32>
    %92 = vector.broadcast %91 : vector<128x1xf32> to vector<128x32xf32>
    %93 = arith.mulf %90, %92 : vector<128x32xf32>
    %c0_48 = arith.constant 0 : index
    %c0_49 = arith.constant 0 : index
    %c96_50 = arith.constant 96 : index
    %94 = vector.load %arg5[%c0_48, %c0_49, %c96_50] : memref<1x128x128xf32, #tpu.memory_space<vmem>>, vector<1x128x32xf32>
    %95 = vector.shape_cast %94 : vector<1x128x32xf32> to vector<128x32xf32>
    %96 = vector.shape_cast %93 : vector<128x32xf32> to vector<1x128x32xf32>
    tpu.vector_store %arg5[%c0_48, %c0_49, %c96_50], %96 {strides = array<i32>} : memref<1x128x128xf32, #tpu.memory_space<vmem>>, vector<1x128x32xf32>,
    return
  }
  func.func @transform_0(%arg0: i32, %arg1: i32) -> (i32, i32, i32) {
    %c0_i32 = arith.constant 0 : i32
    %c0_i32_0 = arith.constant 0 : i32
    return %arg0, %arg1, %c0_i32 : i32, i32, i32
  }
  func.func @transform_1(%arg0: i32, %arg1: i32) -> (i32, i32, i32) {
    %c0_i32 = arith.constant 0 : i32
    %c0_i32_0 = arith.constant 0 : i32
    %c0_i32_1 = arith.constant 0 : i32
    return %arg0, %c0_i32, %c0_i32_0 : i32, i32, i32
  }
  func.func @transform_2(%arg0: i32, %arg1: i32) -> (i32, i32, i32) {
    %c0_i32 = arith.constant 0 : i32
    %c0_i32_0 = arith.constant 0 : i32
    %c0_i32_1 = arith.constant 0 : i32
    return %arg0, %c0_i32, %c0_i32_0 : i32, i32, i32
  }
  func.func @transform_3(%arg0: i32, %arg1: i32) -> (i32, i32, i32) {
    %c0_i32 = arith.constant 0 : i32
    %c0_i32_0 = arith.constant 0 : i32
    return %arg0, %arg1, %c0_i32 : i32, i32, i32
  }
}

</mosaic_0001>

<llo_original>
// kernel: minimal_a2a_attn_op.1
$region0: #{minimal_a2a_attn_op.1}
  #allocation0 [shape = 'u32[]', space=smem, size = 0x4, offset = 0x4, fixed_abs, tag = 'smem constant byte address 0x4 - core index']
  #allocation1 [shape = 'u32[144,128]{1,0:T(1,128)}', space=vmem, size = 0x12000, scoped, tag = 'internal scratch']
  %s0 = inlined_call_operand.vmem [shape: f32[2,128,128], index: 0, kind: input, shape index: {}]
  %s1 = inlined_call_operand.vmem [shape: f32[2,128,128], index: 1, kind: input, shape index: {}]
  %s2 = inlined_call_operand.vmem [shape: f32[2,128,128], index: 2, kind: input, shape index: {}]
  %s3 = inlined_call_operand.hbm [shape: f32[2,128,128], index: 3, kind: output, shape index: {}]
  %s4 = sld [smem:[#allocation0]]
  $region45: #{minimal_a2a_attn_op.1} parent=0
    _
  %s6 = ssub.s32 1, %s4
  %s7 = scalar_select 0, %s6, %s4
  $region1: #{minimal_a2a_attn_op.1} parent=0
    #allocation2 [shape = 'u8[131072]{0}', space=vmem, size = 0x20000, scoped, tag = 'output window, operand 0']
    #allocation3 [shape = 's32[2]{0}', space=sflag, size = 0x8, scoped, tag = 'scoped memory for minimal_a2a_attn_op.1']
    %8 = vsyncpa [#allocation3], 0
    %s9 = scalar_lea.sflag [#allocation3], 1
    %10 = vsyncpa %s9, 0
    loop: start=0, step=1, limit=4
    $region2: #{minimal_a2a_attn_op.1} parent=1 // loop_pre_header
      _
    $region3: #{minimal_a2a_attn_op.1} parent=1 // loop_header
      %s12 = sphi 0, %s16
      %p13 = scmp.ge.s32.totalorder %s12, 4
      %s19 = sphi 0, %s31
      %s20 = sphi 0, %s27
      %s21 = sphi 0, %s19
      %s22 = sphi 0, %s20
      %s23 = sphi 0, %s21
      %s24 = sphi 0, %s22
      %s36 = sphi 0, %s38
      %s39 = sphi 0, %s36
      %s40 = sphi 0, %s39
      %s56 = sphi 0, %s40
      %s62 = sphi 0, %s64
      %s65 = sphi 0, %s62
      %s66 = sphi 0, %s65
      %s82 = sphi 0, %s66
      %s88 = sphi 0, %s90
      %s91 = sphi 0, %s88
      %s92 = sphi 0, %s91
      %s108 = sphi 0, %s92
      %s116 = sphi 0, %s118
      %s119 = sphi 0, %s116
      %s120 = sphi 0, %s119
      %s136 = sphi 0, %s120
    $region4: #{minimal_a2a_attn_op.1} parent=1 // loop_header_branch
      %15 = sbr.rel (%p13) target = $region8
    $region5: #{minimal_a2a_attn_op.1} parent=1 // loop_body
      %s17 = ssub.s32 %s12, 1
      %s18 = ssub.s32 %s12, 2
      %s25 = sadd.s32 1, %s20
      %p26 = scmp.ge.s32.totalorder %s25, 1
      %s27 = scalar_select %p26, 0, %s25
      %s28 = sadd.s32 1, %s19
      %s29 = scalar_select %p26, %s28, %s19
      %p30 = scmp.ge.s32.totalorder %s29, 2
      %s31 = scalar_select %p30, 0, %s29
      %s32 = ssub.s32 %s19, %s31
      %s33 = ssub.s32 %s20, %s27
      %s34 = sor.u32 %s32, %s33
      %p35 = scmp.eq.s32.totalorder %s34, 0
      %s37 = sadd.s32 %s36, 1
      %s38 = scalar_select %p35, %s36, %s37
      %p41 = pneg %p35
      %p42 = scmp.eq.s32.totalorder %s12, 1
      %p43 = por %p41, %p42
      %p44 = scmp.ne.s32.totalorder %s36, %s39
      %p45 = scmp.eq.s32.totalorder %s12, 0
      %p46 = por %p44, %p45
      %p47 = scmp.ne.s32.totalorder %s36, %s39
      %p48 = scmp.eq.s32.totalorder %s17, 1
      %p49 = por %p47, %p48
      %p50 = scmp.ne.s32.totalorder %s39, %s40
      %p51 = scmp.eq.s32.totalorder %s17, 0
      %p52 = por %p50, %p51
      %p53 = scmp.ne.s32.totalorder %s39, %s40
      %p54 = scmp.eq.s32.totalorder %s18, 1
      %p55 = por %p53, %p54
      %p57 = scmp.ne.s32.totalorder %s40, %s56
      %p58 = scmp.eq.s32.totalorder %s18, 0
      %p59 = por %p57, %p58
      %s60 = ssub.s32 %s19, %s31
      %p61 = scmp.eq.s32.totalorder %s60, 0
      %s63 = sadd.s32 %s62, 1
      %s64 = scalar_select %p61, %s62, %s63
      %p67 = pneg %p61
      %p68 = scmp.eq.s32.totalorder %s12, 1
      %p69 = por %p67, %p68
      %p70 = scmp.ne.s32.totalorder %s62, %s65
      %p71 = scmp.eq.s32.totalorder %s12, 0
      %p72 = por %p70, %p71
      %p73 = scmp.ne.s32.totalorder %s62, %s65
      %p74 = scmp.eq.s32.totalorder %s17, 1
      %p75 = por %p73, %p74
      %p76 = scmp.ne.s32.totalorder %s65, %s66
      %p77 = scmp.eq.s32.totalorder %s17, 0
      %p78 = por %p76, %p77
      %p79 = scmp.ne.s32.totalorder %s65, %s66
      %p80 = scmp.eq.s32.totalorder %s18, 1
      %p81 = por %p79, %p80
      %p83 = scmp.ne.s32.totalorder %s66, %s82
      %p84 = scmp.eq.s32.totalorder %s18, 0
      %p85 = por %p83, %p84
      %s86 = ssub.s32 %s19, %s31
      %p87 = scmp.eq.s32.totalorder %s86, 0
      %s89 = sadd.s32 %s88, 1
      %s90 = scalar_select %p87, %s88, %s89
      %p93 = pneg %p87
      %p94 = scmp.eq.s32.totalorder %s12, 1
      %p95 = por %p93, %p94
      %p96 = scmp.ne.s32.totalorder %s88, %s91
      %p97 = scmp.eq.s32.totalorder %s12, 0
      %p98 = por %p96, %p97
      %p99 = scmp.ne.s32.totalorder %s88, %s91
      %p100 = scmp.eq.s32.totalorder %s17, 1
      %p101 = por %p99, %p100
      %p102 = scmp.ne.s32.totalorder %s91, %s92
      %p103 = scmp.eq.s32.totalorder %s17, 0
      %p104 = por %p102, %p103
      %p105 = scmp.ne.s32.totalorder %s91, %s92
      %p106 = scmp.eq.s32.totalorder %s18, 1
      %p107 = por %p105, %p106
      %p109 = scmp.ne.s32.totalorder %s92, %s108
      %p110 = scmp.eq.s32.totalorder %s18, 0
      %p111 = por %p109, %p110
      %s112 = ssub.s32 %s19, %s31
      %s113 = ssub.s32 %s20, %s27
      %s114 = sor.u32 %s112, %s113
      %p115 = scmp.eq.s32.totalorder %s114, 0
      %s117 = sadd.s32 %s116, 1
      %s118 = scalar_select %p115, %s116, %s117
      %p121 = pneg %p115
      %p122 = scmp.eq.s32.totalorder %s12, 1
      %p123 = por %p121, %p122
      %p124 = scmp.ne.s32.totalorder %s116, %s119
      %p125 = scmp.eq.s32.totalorder %s12, 0
      %p126 = por %p124, %p125
      %p127 = scmp.ne.s32.totalorder %s116, %s119
      %p128 = scmp.eq.s32.totalorder %s17, 1
      %p129 = por %p127, %p128
      %p130 = scmp.ne.s32.totalorder %s119, %s120
      %p131 = scmp.eq.s32.totalorder %s17, 0
      %p132 = por %p130, %p131
      %p133 = scmp.ne.s32.totalorder %s119, %s120
      %p134 = scmp.eq.s32.totalorder %s18, 1
      %p135 = por %p133, %p134
      %p137 = scmp.ne.s32.totalorder %s120, %s136
      %p138 = scmp.eq.s32.totalorder %s18, 0
      %p139 = por %p137, %p138
      %p140 = scmp.le.s32.totalorder 1, %s12
      %p141 = scmp.lt.s32.totalorder %s12, 3
      %p142 = pnand %p140, %p141
      %p143 = pneg %p142
      // Predicated region
      $region9: #{minimal_a2a_attn_op.1} parent=5 // pred_check
        _
      $region10: #{minimal_a2a_attn_op.1} parent=5 // pred_check_branch
        %145 = sbr.rel (%p142) target = $region12
      $region11: #{minimal_a2a_attn_op.1} parent=5 // pred_region
        %s146 = ssub.s32 %s12, 1
      $region12: #{minimal_a2a_attn_op.1} parent=5 // pred_fallthru
        _
      %p147 = scmp.lt.s32.totalorder %s12, 2
      // Predicated region
      $region13: #{minimal_a2a_attn_op.1} parent=5 // pred_check
        %p148 = pneg %p147
      $region14: #{minimal_a2a_attn_op.1} parent=5 // pred_check_branch
        %150 = sbr.rel (%p148) target = $region16
      $region15: #{minimal_a2a_attn_op.1} parent=5 // pred_region
        // Predicated region
        $region17: #{minimal_a2a_attn_op.1} parent=15 // pred_check
          %p151 = pneg %p46
        $region18: #{minimal_a2a_attn_op.1} parent=15 // pred_check_branch
          %153 = sbr.rel (%p151) target = $region20
        $region19: #{minimal_a2a_attn_op.1} parent=15 // pred_region
          %s154 = smul.u32 16, %s20
          %p155 = scmp.lt.s32.totalorder %s19, 1
          %s156 = scalar_select %p155, %s19, 1
          %p157 = scmp.lt.s32.totalorder %s154, 15
          %s158 = scalar_select %p157, %s154, 15
          %s159 = smul.addr %s156, 16
          %s160 = sadd.s32 %s158, %s159
          %s161 = smul.addr %s160, 8
          %s162 = scalar_lea.vmem %s0, %s161
          %s163 = smul.u32 16, %s20
        $region20: #{minimal_a2a_attn_op.1} parent=15 // pred_fallthru
          _
        // Predicated region
        $region21: #{minimal_a2a_attn_op.1} parent=15 // pred_check
          %p164 = pneg %p72
        $region22: #{minimal_a2a_attn_op.1} parent=15 // pred_check_branch
          %166 = sbr.rel (%p164) target = $region24
        $region23: #{minimal_a2a_attn_op.1} parent=15 // pred_region
          %p167 = scmp.lt.s32.totalorder %s19, 1
          %s168 = scalar_select %p167, %s19, 1
          %s169 = smul.addr %s168, 16
          %s170 = smul.addr %s169, 8
          %s171 = scalar_lea.vmem %s1, %s170
        $region24: #{minimal_a2a_attn_op.1} parent=15 // pred_fallthru
          _
        // Predicated region
        $region25: #{minimal_a2a_attn_op.1} parent=15 // pred_check
          %p172 = pneg %p98
        $region26: #{minimal_a2a_attn_op.1} parent=15 // pred_check_branch
          %174 = sbr.rel (%p172) target = $region28
        $region27: #{minimal_a2a_attn_op.1} parent=15 // pred_region
          %p175 = scmp.lt.s32.totalorder %s19, 1
          %s176 = scalar_select %p175, %s19, 1
          %s177 = smul.addr %s176, 16
          %s178 = smul.addr %s177, 8
          %s179 = scalar_lea.vmem %s2, %s178
        $region28: #{minimal_a2a_attn_op.1} parent=15 // pred_fallthru
          _
      $region16: #{minimal_a2a_attn_op.1} parent=5 // pred_fallthru
        _
      %p180 = scmp.le.s32.totalorder 1, %s12
      %p181 = scmp.lt.s32.totalorder %s12, 3
      %p182 = pnand %p180, %p181
      %p183 = pneg %p182
      // Predicated region
      $region29: #{minimal_a2a_attn_op.1} parent=5 // pred_check
        _
      $region30: #{minimal_a2a_attn_op.1} parent=5 // pred_check_branch
        %185 = sbr.rel (%p182) target = $region32
      $region31: #{minimal_a2a_attn_op.1} parent=5 // pred_region
        %s186 = ssub.s32 %s12, 1
        %s187 = smul.u32 16, %s22
        %p188 = scmp.lt.s32.totalorder %s21, 1
        %s189 = scalar_select %p188, %s21, 1
        %p190 = scmp.lt.s32.totalorder %s187, 15
        %s191 = scalar_select %p190, %s187, 15
        %s192 = smul.addr %s189, 16
        %s193 = sadd.s32 %s191, %s192
        %s194 = smul.addr %s193, 8
        %s195 = scalar_lea.vmem %s0, %s194
        %p196 = pneg %p52
        %p197 = pneg %p49
        %p198 = scmp.lt.s32.totalorder %s21, 1
        %s199 = scalar_select %p198, %s21, 1
        %s200 = smul.addr %s199, 16
        %s201 = smul.addr %s200, 8
        %s202 = scalar_lea.vmem %s1, %s201
        %p203 = pneg %p78
        %p204 = pneg %p75
        %p205 = scmp.lt.s32.totalorder %s21, 1
        %s206 = scalar_select %p205, %s21, 1
        %s207 = smul.addr %s206, 16
        %s208 = smul.addr %s207, 8
        %s209 = scalar_lea.vmem %s2, %s208
        %p210 = pneg %p104
        %p211 = pneg %p101
        %p212 = pneg %p132
        %p213 = pneg %p129
        %s214 = sand.u32 %s119, 1
        %s215 = scalar_lea.sflag [#allocation3], %s214
        %s216 = sand.u32 %s119, 1
        %s217 = smul.addr %s216, 128
        %s218 = scalar_lea.vmem [#allocation2], %s217
        %s219 = smul.u32 16, %s22
        %p220 = scmp.lt.s32.totalorder %s21, 1
        %s221 = scalar_select %p220, %s21, 1
        %p222 = scmp.lt.s32.totalorder %s219, 15
        %s223 = scalar_select %p222, %s219, 15
        %s224 = smul.addr %s221, 16
        %s225 = sadd.s32 %s223, %s224
        %s226 = smul.addr %s225, 8
        %s227 = scalar_lea.vmem %s0, %s226
        %s228 = smul.u32 16, %s22
        %p229 = scmp.lt.s32.totalorder %s21, 1
        %s230 = scalar_select %p229, %s21, 1
        %s231 = smul.addr %s230, 16
        %s232 = smul.addr %s231, 8
        %s233 = scalar_lea.vmem %s1, %s232
        %p234 = scmp.lt.s32.totalorder %s21, 1
        %s235 = scalar_select %p234, %s21, 1
        %s236 = smul.addr %s235, 16
        %s237 = smul.addr %s236, 8
        %s238 = scalar_lea.vmem %s2, %s237
        %s239 = smul.u32 16, %s22
        %v241 = vld [vmem:[%s227] sm:$0xff]
        %v242 = vld [vmem:[%s227 + $0x8] sm:$0xff]
        %v243 = vld [vmem:[%s227 + $0x10] sm:$0xff]
        %v244 = vld [vmem:[%s227 + $0x18] sm:$0xff]
        %v245 = vld [vmem:[%s227 + $0x20] sm:$0xff]
        %v246 = vld [vmem:[%s227 + $0x28] sm:$0xff]
        %v247 = vld [vmem:[%s227 + $0x30] sm:$0xff]
        %v248 = vld [vmem:[%s227 + $0x38] sm:$0xff]
        %v249 = vld [vmem:[%s227 + $0x40] sm:$0xff]
        %v250 = vld [vmem:[%s227 + $0x48] sm:$0xff]
        %v251 = vld [vmem:[%s227 + $0x50] sm:$0xff]
        %v252 = vld [vmem:[%s227 + $0x58] sm:$0xff]
        %v253 = vld [vmem:[%s227 + $0x60] sm:$0xff]
        %v254 = vld [vmem:[%s227 + $0x68] sm:$0xff]
        %v255 = vld [vmem:[%s227 + $0x70] sm:$0xff]
        %v256 = vld [vmem:[%s227 + $0x78] sm:$0xff]
        %v257 = vmul.f32 %v241, 0.17677669
        %v258 = vmul.f32 %v242, 0.17677669
        %v259 = vmul.f32 %v243, 0.17677669
        %v260 = vmul.f32 %v244, 0.17677669
        %v261 = vmul.f32 %v245, 0.17677669
        %v262 = vmul.f32 %v246, 0.17677669
        %v263 = vmul.f32 %v247, 0.17677669
        %v264 = vmul.f32 %v248, 0.17677669
        %v265 = vmul.f32 %v249, 0.17677669
        %v266 = vmul.f32 %v250, 0.17677669
        %v267 = vmul.f32 %v251, 0.17677669
        %v268 = vmul.f32 %v252, 0.17677669
        %v269 = vmul.f32 %v253, 0.17677669
        %v270 = vmul.f32 %v254, 0.17677669
        %v271 = vmul.f32 %v255, 0.17677669
        %v272 = vmul.f32 %v256, 0.17677669
        %v273 = vpack.c.bf16 %v258, %v257
        %v274 = vpack.c.bf16 %v260, %v259
        %v275 = vpack.c.bf16 %v262, %v261
        %v276 = vpack.c.bf16 %v264, %v263
        %v277 = vpack.c.bf16 %v266, %v265
        %v278 = vpack.c.bf16 %v268, %v267
        %v279 = vpack.c.bf16 %v270, %v269
        %v280 = vpack.c.bf16 %v272, %v271
        %v281 = vld [vmem:[%s233] sm:$0xff]
        %v282 = vld [vmem:[%s233 + $0x8] sm:$0xff]
        %v283 = vld [vmem:[%s233 + $0x10] sm:$0xff]
        %v284 = vld [vmem:[%s233 + $0x18] sm:$0xff]
        %v285 = vld [vmem:[%s233 + $0x20] sm:$0xff]
        %v286 = vld [vmem:[%s233 + $0x28] sm:$0xff]
        %v287 = vld [vmem:[%s233 + $0x30] sm:$0xff]
        %v288 = vld [vmem:[%s233 + $0x38] sm:$0xff]
        %v289 = vld [vmem:[%s233 + $0x40] sm:$0xff]
        %v290 = vld [vmem:[%s233 + $0x48] sm:$0xff]
        %v291 = vld [vmem:[%s233 + $0x50] sm:$0xff]
        %v292 = vld [vmem:[%s233 + $0x58] sm:$0xff]
        %v293 = vld [vmem:[%s233 + $0x60] sm:$0xff]
        %v294 = vld [vmem:[%s233 + $0x68] sm:$0xff]
        %v295 = vld [vmem:[%s233 + $0x70] sm:$0xff]
        %v296 = vld [vmem:[%s233 + $0x78] sm:$0xff]
        %v297 = vpack.c.bf16 %v282, %v281
        %v298 = vpack.c.bf16 %v284, %v283
        %v299 = vpack.c.bf16 %v286, %v285
        %v300 = vpack.c.bf16 %v288, %v287
        %v301 = vpack.c.bf16 %v290, %v289
        %v302 = vpack.c.bf16 %v292, %v291
        %v303 = vpack.c.bf16 %v294, %v293
        %v304 = vpack.c.bf16 %v296, %v295
        %v305 = vld [vmem:[%s238] sm:$0xff]
        %v306 = vld [vmem:[%s238 + $0x8] sm:$0xff]
        %v307 = vld [vmem:[%s238 + $0x10] sm:$0xff]
        %v308 = vld [vmem:[%s238 + $0x18] sm:$0xff]
        %v309 = vld [vmem:[%s238 + $0x20] sm:$0xff]
        %v310 = vld [vmem:[%s238 + $0x28] sm:$0xff]
        %v311 = vld [vmem:[%s238 + $0x30] sm:$0xff]
        %v312 = vld [vmem:[%s238 + $0x38] sm:$0xff]
        %v313 = vld [vmem:[%s238 + $0x40] sm:$0xff]
        %v314 = vld [vmem:[%s238 + $0x48] sm:$0xff]
        %v315 = vld [vmem:[%s238 + $0x50] sm:$0xff]
        %v316 = vld [vmem:[%s238 + $0x58] sm:$0xff]
        %v317 = vld [vmem:[%s238 + $0x60] sm:$0xff]
        %v318 = vld [vmem:[%s238 + $0x68] sm:$0xff]
        %v319 = vld [vmem:[%s238 + $0x70] sm:$0xff]
        %v320 = vld [vmem:[%s238 + $0x78] sm:$0xff]
        %v321 = vpack.c.bf16 %v306, %v305
        %v322 = vpack.c.bf16 %v308, %v307
        %v323 = vpack.c.bf16 %v310, %v309
        %v324 = vpack.c.bf16 %v312, %v311
        %v325 = vpack.c.bf16 %v314, %v313
        %v326 = vpack.c.bf16 %v316, %v315
        %v327 = vpack.c.bf16 %v318, %v317
        %v328 = vpack.c.bf16 %v320, %v319
        %vm329 = vcmask 261120
        %v331 = vsel %vm329, %v273, 0
        %v334 = vsel %vm329, %v274, 0
        %v337 = vsel %vm329, %v275, 0
        %v340 = vsel %vm329, %v276, 0
        %v343 = vsel %vm329, %v277, 0
        %v346 = vsel %vm329, %v278, 0
        %v349 = vsel %vm329, %v279, 0
        %v352 = vsel %vm329, %v280, 0
        %v355 = vsel %vm329, %v297, 0
        %v358 = vsel %vm329, %v298, 0
        %v361 = vsel %vm329, %v299, 0
        %v364 = vsel %vm329, %v300, 0
        %v367 = vsel %vm329, %v301, 0
        %v370 = vsel %vm329, %v302, 0
        %v373 = vsel %vm329, %v303, 0
        %v376 = vsel %vm329, %v304, 0
        %378 = vmatprep.subr.bf16.mxu0 0
        %379 = vmatpush1.bf16.xpose.msra.mxu0 %v355
        %380 = vmatprep.subr.bf16.mxu0 0
        %381 = vmatpush1.bf16.xpose.msra.mxu0 %v358
        %382 = vmatprep.subr.bf16.mxu0 0
        %383 = vmatpush1.bf16.xpose.msra.mxu0 %v361
        %384 = vmatprep.subr.bf16.mxu0 0
        %385 = vmatpush1.bf16.xpose.msra.mxu0 %v364
        %386 = vmatprep.subr.bf16.mxu0 0
        %387 = vmatpush1.bf16.xpose.msra.mxu0 %v367
        %388 = vmatprep.subr.bf16.mxu0 0
        %389 = vmatpush1.bf16.xpose.msra.mxu0 %v370
        %390 = vmatprep.subr.bf16.mxu0 0
        %391 = vmatpush1.bf16.xpose.msra.mxu0 %v373
        %392 = vmatprep.subr.bf16.mxu0 0
        %393 = vmatpush1.bf16.xpose.msra.mxu0 %v376
        %394 = vmatprep.subr.bf16.mxu0 0
        %395 = vmatpush1.bf16.xpose.msra.mxu0 0
        %396 = vmatprep.subr.bf16.mxu0 0
        %397 = vmatpush1.bf16.xpose.msra.mxu0 0
        %398 = vmatprep.subr.bf16.mxu0 0
        %399 = vmatpush1.bf16.xpose.msra.mxu0 0
        %400 = vmatprep.subr.bf16.mxu0 0
        %401 = vmatpush1.bf16.xpose.msra.mxu0 0
        %402 = vmatprep.subr.bf16.mxu0 0
        %403 = vmatpush1.bf16.xpose.msra.mxu0 0
        %404 = vmatprep.subr.bf16.mxu0 0
        %405 = vmatpush1.bf16.xpose.msra.mxu0 0
        %406 = vmatprep.subr.bf16.mxu0 0
        %407 = vmatpush1.bf16.xpose.msra.mxu0 0
        %408 = vmatprep.subr.bf16.mxu0 0
        %409 = vmatpush1.bf16.xpose.msra.mxu0 0
        %410 = vmatprep.mubr.bf16.mxu0 0
        %411 = vmatmul.mubr.bf16.gmra.mrb[0].mxu0 %v331
        %v412 = vpop.f32.mrb[0].mxu0
        %v413 = vadd.f32 0.0, %v412
        %v414 = vpop.f32.mrb[0].mxu0
        %v415 = vpop.f32.mrb[0].mxu0
        %v416 = vadd.f32 0.0, %v415
        %v417 = vpop.f32.mrb[0].mxu0
        %418 = vmatprep.mubr.bf16.mxu0 0
        %419 = vmatmul.mubr.bf16.gmra.mrb[0].mxu0 %v334
        %v420 = vpop.f32.mrb[0].mxu0
        %v421 = vadd.f32 0.0, %v420
        %v422 = vpop.f32.mrb[0].mxu0
        %v423 = vpop.f32.mrb[0].mxu0
        %v424 = vadd.f32 0.0, %v423
        %v425 = vpop.f32.mrb[0].mxu0
        %426 = vmatprep.mubr.bf16.mxu0 0
        %427 = vmatmul.mubr.bf16.gmra.mrb[0].mxu0 %v337
        %v428 = vpop.f32.mrb[0].mxu0
        %v429 = vadd.f32 0.0, %v428
        %v430 = vpop.f32.mrb[0].mxu0
        %v431 = vpop.f32.mrb[0].mxu0
        %v432 = vadd.f32 0.0, %v431
        %v433 = vpop.f32.mrb[0].mxu0
        %434 = vmatprep.mubr.bf16.mxu0 0
        %435 = vmatmul.mubr.bf16.gmra.mrb[0].mxu0 %v340
        %v436 = vpop.f32.mrb[0].mxu0
        %v437 = vadd.f32 0.0, %v436
        %v438 = vpop.f32.mrb[0].mxu0
        %v439 = vpop.f32.mrb[0].mxu0
        %v440 = vadd.f32 0.0, %v439
        %v441 = vpop.f32.mrb[0].mxu0
        %442 = vmatprep.mubr.bf16.mxu0 0
        %443 = vmatmul.mubr.bf16.gmra.mrb[0].mxu0 %v343
        %v444 = vpop.f32.mrb[0].mxu0
        %v445 = vadd.f32 0.0, %v444
        %v446 = vpop.f32.mrb[0].mxu0
        %v447 = vpop.f32.mrb[0].mxu0
        %v448 = vadd.f32 0.0, %v447
        %v449 = vpop.f32.mrb[0].mxu0
        %450 = vmatprep.mubr.bf16.mxu0 0
        %451 = vmatmul.mubr.bf16.gmra.mrb[0].mxu0 %v346
        %v452 = vpop.f32.mrb[0].mxu0
        %v453 = vadd.f32 0.0, %v452
        %v454 = vpop.f32.mrb[0].mxu0
        %v455 = vpop.f32.mrb[0].mxu0
        %v456 = vadd.f32 0.0, %v455
        %v457 = vpop.f32.mrb[0].mxu0
        %458 = vmatprep.mubr.bf16.mxu0 0
        %459 = vmatmul.mubr.bf16.gmra.mrb[0].mxu0 %v349
        %v460 = vpop.f32.mrb[0].mxu0
        %v461 = vadd.f32 0.0, %v460
        %v462 = vpop.f32.mrb[0].mxu0
        %v463 = vpop.f32.mrb[0].mxu0
        %v464 = vadd.f32 0.0, %v463
        %v465 = vpop.f32.mrb[0].mxu0
        %466 = vmatprep.mubr.bf16.mxu0 0
        %467 = vmatmul.mubr.bf16.gmra.mrb[0].mxu0 %v352
        %v468 = vpop.f32.mrb[0].mxu0
        %v469 = vadd.f32 0.0, %v468
        %v470 = vpop.f32.mrb[0].mxu0
        %v471 = vpop.f32.mrb[0].mxu0
        %v472 = vadd.f32 0.0, %v471
        %v473 = vpop.f32.mrb[0].mxu0
        %474 = vdwg.mxu0
        %475 = vmax.xlane.f32.xlu0 %v413
        %v476 = vpop.xlane.xlu0 %475
        %477 = vmax.xlane.f32.xlu0 %v416
        %v478 = vpop.xlane.xlu0 %477
        %479 = vmax.xlane.f32.xlu0 %v421
        %v480 = vpop.xlane.xlu0 %479
        %481 = vmax.xlane.f32.xlu0 %v424
        %v482 = vpop.xlane.xlu0 %481
        %483 = vmax.xlane.f32.xlu0 %v429
        %v484 = vpop.xlane.xlu0 %483
        %485 = vmax.xlane.f32.xlu0 %v432
        %v486 = vpop.xlane.xlu0 %485
        %487 = vmax.xlane.f32.xlu0 %v437
        %v488 = vpop.xlane.xlu0 %487
        %489 = vmax.xlane.f32.xlu0 %v440
        %v490 = vpop.xlane.xlu0 %489
        %491 = vmax.xlane.f32.xlu0 %v445
        %v492 = vpop.xlane.xlu0 %491
        %493 = vmax.xlane.f32.xlu0 %v448
        %v494 = vpop.xlane.xlu0 %493
        %495 = vmax.xlane.f32.xlu0 %v453
        %v496 = vpop.xlane.xlu0 %495
        %497 = vmax.xlane.f32.xlu0 %v456
        %v498 = vpop.xlane.xlu0 %497
        %499 = vmax.xlane.f32.xlu0 %v461
        %v500 = vpop.xlane.xlu0 %499
        %501 = vmax.xlane.f32.xlu0 %v464
        %v502 = vpop.xlane.xlu0 %501
        %503 = vmax.xlane.f32.xlu0 %v469
        %v504 = vpop.xlane.xlu0 %503
        %505 = vmax.xlane.f32.xlu0 %v472
        %v506 = vpop.xlane.xlu0 %505
        %v507 = vsub.f32 %v413, %v476
        %v508 = vsub.f32 %v416, %v478
        %v509 = vsub.f32 %v421, %v480
        %v510 = vsub.f32 %v424, %v482
        %v511 = vsub.f32 %v429, %v484
        %v512 = vsub.f32 %v432, %v486
        %v513 = vsub.f32 %v437, %v488
        %v514 = vsub.f32 %v440, %v490
        %v515 = vsub.f32 %v445, %v492
        %v516 = vsub.f32 %v448, %v494
        %v517 = vsub.f32 %v453, %v496
        %v518 = vsub.f32 %v456, %v498
        %v519 = vsub.f32 %v461, %v500
        %v520 = vsub.f32 %v464, %v502
        %v521 = vsub.f32 %v469, %v504
        %v522 = vsub.f32 %v472, %v506
        %v523 = vmul.f32 %v507, 1.442695
        %v524 = vpow.pop %v523
        %v525 = vmul.f32 %v508, 1.442695
        %v526 = vpow.pop %v525
        %v527 = vmul.f32 %v509, 1.442695
        %v528 = vpow.pop %v527
        %v529 = vmul.f32 %v510, 1.442695
        %v530 = vpow.pop %v529
        %v531 = vmul.f32 %v511, 1.442695
        %v532 = vpow.pop %v531
        %v533 = vmul.f32 %v512, 1.442695
        %v534 = vpow.pop %v533
        %v535 = vmul.f32 %v513, 1.442695
        %v536 = vpow.pop %v535
        %v537 = vmul.f32 %v514, 1.442695
        %v538 = vpow.pop %v537
        %v539 = vmul.f32 %v515, 1.442695
        %v540 = vpow.pop %v539
        %v541 = vmul.f32 %v516, 1.442695
        %v542 = vpow.pop %v541
        %v543 = vmul.f32 %v517, 1.442695
        %v544 = vpow.pop %v543
        %v545 = vmul.f32 %v518, 1.442695
        %v546 = vpow.pop %v545
        %v547 = vmul.f32 %v519, 1.442695
        %v548 = vpow.pop %v547
        %v549 = vmul.f32 %v520, 1.442695
        %v550 = vpow.pop %v549
        %v551 = vmul.f32 %v521, 1.442695
        %v552 = vpow.pop %v551
        %v553 = vmul.f32 %v522, 1.442695
        %v554 = vpow.pop %v553
        %555 = vadd.xlane.f32.xlu0 %v524
        %v556 = vpop.xlane.xlu0 %555
        %557 = vadd.xlane.f32.xlu0 %v526
        %v558 = vpop.xlane.xlu0 %557
        %559 = vadd.xlane.f32.xlu0 %v528
        %v560 = vpop.xlane.xlu0 %559
        %561 = vadd.xlane.f32.xlu0 %v530
        %v562 = vpop.xlane.xlu0 %561
        %563 = vadd.xlane.f32.xlu0 %v532
        %v564 = vpop.xlane.xlu0 %563
        %565 = vadd.xlane.f32.xlu0 %v534
        %v566 = vpop.xlane.xlu0 %565
        %567 = vadd.xlane.f32.xlu0 %v536
        %v568 = vpop.xlane.xlu0 %567
        %569 = vadd.xlane.f32.xlu0 %v538
        %v570 = vpop.xlane.xlu0 %569
        %571 = vadd.xlane.f32.xlu0 %v540
        %v572 = vpop.xlane.xlu0 %571
        %573 = vadd.xlane.f32.xlu0 %v542
        %v574 = vpop.xlane.xlu0 %573
        %575 = vadd.xlane.f32.xlu0 %v544
        %v576 = vpop.xlane.xlu0 %575
        %577 = vadd.xlane.f32.xlu0 %v546
        %v578 = vpop.xlane.xlu0 %577
        %579 = vadd.xlane.f32.xlu0 %v548
        %v580 = vpop.xlane.xlu0 %579
        %581 = vadd.xlane.f32.xlu0 %v550
        %v582 = vpop.xlane.xlu0 %581
        %583 = vadd.xlane.f32.xlu0 %v552
        %v584 = vpop.xlane.xlu0 %583
        %585 = vadd.xlane.f32.xlu0 %v554
        %v586 = vpop.xlane.xlu0 %585
        %v587 = vpack.c.bf16 %v526, %v524
        %v588 = vpack.c.bf16 %v530, %v528
        %v589 = vpack.c.bf16 %v534, %v532
        %v590 = vpack.c.bf16 %v538, %v536
        %v591 = vpack.c.bf16 %v542, %v540
        %v592 = vpack.c.bf16 %v546, %v544
        %v593 = vpack.c.bf16 %v550, %v548
        %v594 = vpack.c.bf16 %v554, %v552
        %595 = vmatprep.subr.bf16.mxu0 0
        %596 = vmatpush1.bf16.msra.mxu0 %v321
        %597 = vmatprep.subr.bf16.mxu0 0
        %598 = vmatpush1.bf16.msra.mxu0 %v322
        %599 = vmatprep.subr.bf16.mxu0 0
        %600 = vmatpush1.bf16.msra.mxu0 %v323
        %601 = vmatprep.subr.bf16.mxu0 0
        %602 = vmatpush1.bf16.msra.mxu0 %v324
        %603 = vmatprep.subr.bf16.mxu0 0
        %604 = vmatpush1.bf16.msra.mxu0 %v325
        %605 = vmatprep.subr.bf16.mxu0 0
        %606 = vmatpush1.bf16.msra.mxu0 %v326
        %607 = vmatprep.subr.bf16.mxu0 0
        %608 = vmatpush1.bf16.msra.mxu0 %v327
        %609 = vmatprep.subr.bf16.mxu0 0
        %610 = vmatpush1.bf16.msra.mxu0 %v328
        %611 = vmatprep.subr.bf16.mxu0 0
        %612 = vmatpush1.bf16.msra.mxu0 0
        %613 = vmatprep.subr.bf16.mxu0 0
        %614 = vmatpush1.bf16.msra.mxu0 0
        %615 = vmatprep.subr.bf16.mxu0 0
        %616 = vmatpush1.bf16.msra.mxu0 0
        %617 = vmatprep.subr.bf16.mxu0 0
        %618 = vmatpush1.bf16.msra.mxu0 0
        %619 = vmatprep.subr.bf16.mxu0 0
        %620 = vmatpush1.bf16.msra.mxu0 0
        %621 = vmatprep.subr.bf16.mxu0 0
        %622 = vmatpush1.bf16.msra.mxu0 0
        %623 = vmatprep.subr.bf16.mxu0 0
        %624 = vmatpush1.bf16.msra.mxu0 0
        %625 = vmatprep.subr.bf16.mxu0 0
        %626 = vmatpush1.bf16.msra.mxu0 0
        %627 = vmatprep.mubr.bf16.mxu0 0
        %628 = vmatmul.mubr.bf16.gmra.mrb[0].mxu0 %v587
        %v629 = vpop.f32.mrb[0].mxu0
        %v630 = vadd.f32 0.0, %v629
        %v631 = vpop.f32.mrb[0].mxu0
        %v632 = vpop.f32.mrb[0].mxu0
        %v633 = vadd.f32 0.0, %v632
        %v634 = vpop.f32.mrb[0].mxu0
        %635 = vmatprep.mubr.bf16.mxu0 0
        %636 = vmatmul.mubr.bf16.gmra.mrb[0].mxu0 %v588
        %v637 = vpop.f32.mrb[0].mxu0
        %v638 = vadd.f32 0.0, %v637
        %v639 = vpop.f32.mrb[0].mxu0
        %v640 = vpop.f32.mrb[0].mxu0
        %v641 = vadd.f32 0.0, %v640
        %v642 = vpop.f32.mrb[0].mxu0
        %643 = vmatprep.mubr.bf16.mxu0 0
        %644 = vmatmul.mubr.bf16.gmra.mrb[0].mxu0 %v589
        %v645 = vpop.f32.mrb[0].mxu0
        %v646 = vadd.f32 0.0, %v645
        %v647 = vpop.f32.mrb[0].mxu0
        %v648 = vpop.f32.mrb[0].mxu0
        %v649 = vadd.f32 0.0, %v648
        %v650 = vpop.f32.mrb[0].mxu0
        %651 = vmatprep.mubr.bf16.mxu0 0
        %652 = vmatmul.mubr.bf16.gmra.mrb[0].mxu0 %v590
        %v653 = vpop.f32.mrb[0].mxu0
        %v654 = vadd.f32 0.0, %v653
        %v655 = vpop.f32.mrb[0].mxu0
        %v656 = vpop.f32.mrb[0].mxu0
        %v657 = vadd.f32 0.0, %v656
        %v658 = vpop.f32.mrb[0].mxu0
        %659 = vmatprep.mubr.bf16.mxu0 0
        %660 = vmatmul.mubr.bf16.gmra.mrb[0].mxu0 %v591
        %v661 = vpop.f32.mrb[0].mxu0
        %v662 = vadd.f32 0.0, %v661
        %v663 = vpop.f32.mrb[0].mxu0
        %v664 = vpop.f32.mrb[0].mxu0
        %v665 = vadd.f32 0.0, %v664
        %v666 = vpop.f32.mrb[0].mxu0
        %667 = vmatprep.mubr.bf16.mxu0 0
        %668 = vmatmul.mubr.bf16.gmra.mrb[0].mxu0 %v592
        %v669 = vpop.f32.mrb[0].mxu0
        %v670 = vadd.f32 0.0, %v669
        %v671 = vpop.f32.mrb[0].mxu0
        %v672 = vpop.f32.mrb[0].mxu0
        %v673 = vadd.f32 0.0, %v672
        %v674 = vpop.f32.mrb[0].mxu0
        %675 = vmatprep.mubr.bf16.mxu0 0
        %676 = vmatmul.mubr.bf16.gmra.mrb[0].mxu0 %v593
        %v677 = vpop.f32.mrb[0].mxu0
        %v678 = vadd.f32 0.0, %v677
        %v679 = vpop.f32.mrb[0].mxu0
        %v680 = vpop.f32.mrb[0].mxu0
        %v681 = vadd.f32 0.0, %v680
        %v682 = vpop.f32.mrb[0].mxu0
        %683 = vmatprep.mubr.bf16.mxu0 0
        %684 = vmatmul.mubr.bf16.gmra.mrb[0].mxu0 %v594
        %v685 = vpop.f32.mrb[0].mxu0
        %v686 = vadd.f32 0.0, %v685
        %v687 = vpop.f32.mrb[0].mxu0
        %v688 = vpop.f32.mrb[0].mxu0
        %v689 = vadd.f32 0.0, %v688
        %v690 = vpop.f32.mrb[0].mxu0
        %691 = vdwg.mxu0
        %v692 = vrcp.pop %v556
        %v693 = vrcp.pop %v558
        %v694 = vrcp.pop %v560
        %v695 = vrcp.pop %v562
        %v696 = vrcp.pop %v564
        %v697 = vrcp.pop %v566
        %v698 = vrcp.pop %v568
        %v699 = vrcp.pop %v570
        %v700 = vrcp.pop %v572
        %v701 = vrcp.pop %v574
        %v702 = vrcp.pop %v576
        %v703 = vrcp.pop %v578
        %v704 = vrcp.pop %v580
        %v705 = vrcp.pop %v582
        %v706 = vrcp.pop %v584
        %v707 = vrcp.pop %v586
        %v708 = vmul.f32 %v630, %v692
        %v709 = vmul.f32 %v633, %v693
        %v710 = vmul.f32 %v638, %v694
        %v711 = vmul.f32 %v641, %v695
        %v712 = vmul.f32 %v646, %v696
        %v713 = vmul.f32 %v649, %v697
        %v714 = vmul.f32 %v654, %v698
        %v715 = vmul.f32 %v657, %v699
        %v716 = vmul.f32 %v662, %v700
        %v717 = vmul.f32 %v665, %v701
        %v718 = vmul.f32 %v670, %v702
        %v719 = vmul.f32 %v673, %v703
        %v720 = vmul.f32 %v678, %v704
        %v721 = vmul.f32 %v681, %v705
        %v722 = vmul.f32 %v686, %v706
        %v723 = vmul.f32 %v689, %v707
        %724 = vst.msk [vmem:[%s218] sm:$0xff] %vm329, %v708
        %725 = vst.msk [vmem:[%s218 + $0x8] sm:$0xff] %vm329, %v709
        %726 = vst.msk [vmem:[%s218 + $0x10] sm:$0xff] %vm329, %v710
        %727 = vst.msk [vmem:[%s218 + $0x18] sm:$0xff] %vm329, %v711
        %728 = vst.msk [vmem:[%s218 + $0x20] sm:$0xff] %vm329, %v712
        %729 = vst.msk [vmem:[%s218 + $0x28] sm:$0xff] %vm329, %v713
        %730 = vst.msk [vmem:[%s218 + $0x30] sm:$0xff] %vm329, %v714
        %731 = vst.msk [vmem:[%s218 + $0x38] sm:$0xff] %vm329, %v715
        %732 = vst.msk [vmem:[%s218 + $0x40] sm:$0xff] %vm329, %v716
        %733 = vst.msk [vmem:[%s218 + $0x48] sm:$0xff] %vm329, %v717
        %734 = vst.msk [vmem:[%s218 + $0x50] sm:$0xff] %vm329, %v718
        %735 = vst.msk [vmem:[%s218 + $0x58] sm:$0xff] %vm329, %v719
        %736 = vst.msk [vmem:[%s218 + $0x60] sm:$0xff] %vm329, %v720
        %737 = vst.msk [vmem:[%s218 + $0x68] sm:$0xff] %vm329, %v721
        %738 = vst.msk [vmem:[%s218 + $0x70] sm:$0xff] %vm329, %v722
        %739 = vst.msk [vmem:[%s218 + $0x78] sm:$0xff] %vm329, %v723
        %v740 = vld [vmem:[%s233] sm:$0xff]
        %v741 = vld [vmem:[%s233 + $0x8] sm:$0xff]
        %v742 = vld [vmem:[%s233 + $0x10] sm:$0xff]
        %v743 = vld [vmem:[%s233 + $0x18] sm:$0xff]
        %v744 = vld [vmem:[%s233 + $0x20] sm:$0xff]
        %v745 = vld [vmem:[%s233 + $0x28] sm:$0xff]
        %v746 = vld [vmem:[%s233 + $0x30] sm:$0xff]
        %v747 = vld [vmem:[%s233 + $0x38] sm:$0xff]
        %v748 = vld [vmem:[%s233 + $0x40] sm:$0xff]
        %v749 = vld [vmem:[%s233 + $0x48] sm:$0xff]
        %v750 = vld [vmem:[%s233 + $0x50] sm:$0xff]
        %v751 = vld [vmem:[%s233 + $0x58] sm:$0xff]
        %v752 = vld [vmem:[%s233 + $0x60] sm:$0xff]
        %v753 = vld [vmem:[%s233 + $0x68] sm:$0xff]
        %v754 = vld [vmem:[%s233 + $0x70] sm:$0xff]
        %v755 = vld [vmem:[%s233 + $0x78] sm:$0xff]
        %v756 = vpack.c.bf16 %v741, %v740
        %v757 = vpack.c.bf16 %v743, %v742
        %v758 = vpack.c.bf16 %v745, %v744
        %v759 = vpack.c.bf16 %v747, %v746
        %v760 = vpack.c.bf16 %v749, %v748
        %v761 = vpack.c.bf16 %v751, %v750
        %v762 = vpack.c.bf16 %v753, %v752
        %v763 = vpack.c.bf16 %v755, %v754
        %v764 = vld [vmem:[%s238] sm:$0xff]
        %v765 = vld [vmem:[%s238 + $0x8] sm:$0xff]
        %v766 = vld [vmem:[%s238 + $0x10] sm:$0xff]
        %v767 = vld [vmem:[%s238 + $0x18] sm:$0xff]
        %v768 = vld [vmem:[%s238 + $0x20] sm:$0xff]
        %v769 = vld [vmem:[%s238 + $0x28] sm:$0xff]
        %v770 = vld [vmem:[%s238 + $0x30] sm:$0xff]
        %v771 = vld [vmem:[%s238 + $0x38] sm:$0xff]
        %v772 = vld [vmem:[%s238 + $0x40] sm:$0xff]
        %v773 = vld [vmem:[%s238 + $0x48] sm:$0xff]
        %v774 = vld [vmem:[%s238 + $0x50] sm:$0xff]
        %v775 = vld [vmem:[%s238 + $0x58] sm:$0xff]
        %v776 = vld [vmem:[%s238 + $0x60] sm:$0xff]
        %v777 = vld [vmem:[%s238 + $0x68] sm:$0xff]
        %v778 = vld [vmem:[%s238 + $0x70] sm:$0xff]
        %v779 = vld [vmem:[%s238 + $0x78] sm:$0xff]
        %v780 = vpack.c.bf16 %v765, %v764
        %v781 = vpack.c.bf16 %v767, %v766
        %v782 = vpack.c.bf16 %v769, %v768
        %v783 = vpack.c.bf16 %v771, %v770
        %v784 = vpack.c.bf16 %v773, %v772
        %v785 = vpack.c.bf16 %v775, %v774
        %v786 = vpack.c.bf16 %v777, %v776
        %v787 = vpack.c.bf16 %v779, %v778
        %796 = vrot.lane.b32.xlu0 %v273, 96
        %v797 = vpop.permute.xlu0 %796
        %798 = vrot.lane.b32.xlu0 %v274, 96
        %v799 = vpop.permute.xlu0 %798
        %800 = vrot.lane.b32.xlu0 %v275, 96
        %v801 = vpop.permute.xlu0 %800
        %802 = vrot.lane.b32.xlu0 %v276, 96
        %v803 = vpop.permute.xlu0 %802
        %804 = vrot.lane.b32.xlu0 %v277, 96
        %v805 = vpop.permute.xlu0 %804
        %806 = vrot.lane.b32.xlu0 %v278, 96
        %v807 = vpop.permute.xlu0 %806
        %808 = vrot.lane.b32.xlu0 %v279, 96
        %v809 = vpop.permute.xlu0 %808
        %810 = vrot.lane.b32.xlu0 %v280, 96
        %v811 = vpop.permute.xlu0 %810
        %820 = vrot.lane.b32.xlu0 %v756, 96
        %v821 = vpop.permute.xlu0 %820
        %822 = vrot.lane.b32.xlu0 %v757, 96
        %v823 = vpop.permute.xlu0 %822
        %824 = vrot.lane.b32.xlu0 %v758, 96
        %v825 = vpop.permute.xlu0 %824
        %826 = vrot.lane.b32.xlu0 %v759, 96
        %v827 = vpop.permute.xlu0 %826
        %828 = vrot.lane.b32.xlu0 %v760, 96
        %v829 = vpop.permute.xlu0 %828
        %830 = vrot.lane.b32.xlu0 %v761, 96
        %v831 = vpop.permute.xlu0 %830
        %832 = vrot.lane.b32.xlu0 %v762, 96
        %v833 = vpop.permute.xlu0 %832
        %834 = vrot.lane.b32.xlu0 %v763, 96
        %v835 = vpop.permute.xlu0 %834
        %v837 = vsel %vm329, %v797, 0
        %v840 = vsel %vm329, %v799, 0
        %v843 = vsel %vm329, %v801, 0
        %v846 = vsel %vm329, %v803, 0
        %v849 = vsel %vm329, %v805, 0
        %v852 = vsel %vm329, %v807, 0
        %v855 = vsel %vm329, %v809, 0
        %v858 = vsel %vm329, %v811, 0
        %v861 = vsel %vm329, %v821, 0
        %v864 = vsel %vm329, %v823, 0
        %v867 = vsel %vm329, %v825, 0
        %v870 = vsel %vm329, %v827, 0
        %v873 = vsel %vm329, %v829, 0
        %v876 = vsel %vm329, %v831, 0
        %v879 = vsel %vm329, %v833, 0
        %v882 = vsel %vm329, %v835, 0
        %884 = vmatprep.subr.bf16.mxu0 0
        %885 = vmatpush1.bf16.xpose.msra.mxu0 %v861
        %886 = vmatprep.subr.bf16.mxu0 0
        %887 = vmatpush1.bf16.xpose.msra.mxu0 %v864
        %888 = vmatprep.subr.bf16.mxu0 0
        %889 = vmatpush1.bf16.xpose.msra.mxu0 %v867
        %890 = vmatprep.subr.bf16.mxu0 0
        %891 = vmatpush1.bf16.xpose.msra.mxu0 %v870
        %892 = vmatprep.subr.bf16.mxu0 0
        %893 = vmatpush1.bf16.xpose.msra.mxu0 %v873
        %894 = vmatprep.subr.bf16.mxu0 0
        %895 = vmatpush1.bf16.xpose.msra.mxu0 %v876
        %896 = vmatprep.subr.bf16.mxu0 0
        %897 = vmatpush1.bf16.xpose.msra.mxu0 %v879
        %898 = vmatprep.subr.bf16.mxu0 0
        %899 = vmatpush1.bf16.xpose.msra.mxu0 %v882
        %900 = vmatprep.subr.bf16.mxu0 0
        %901 = vmatpush1.bf16.xpose.msra.mxu0 0
        %902 = vmatprep.subr.bf16.mxu0 0
        %903 = vmatpush1.bf16.xpose.msra.mxu0 0
        %904 = vmatprep.subr.bf16.mxu0 0
        %905 = vmatpush1.bf16.xpose.msra.mxu0 0
        %906 = vmatprep.subr.bf16.mxu0 0
        %907 = vmatpush1.bf16.xpose.msra.mxu0 0
        %908 = vmatprep.subr.bf16.mxu0 0
        %909 = vmatpush1.bf16.xpose.msra.mxu0 0
        %910 = vmatprep.subr.bf16.mxu0 0
        %911 = vmatpush1.bf16.xpose.msra.mxu0 0
        %912 = vmatprep.subr.bf16.mxu0 0
        %913 = vmatpush1.bf16.xpose.msra.mxu0 0
        %914 = vmatprep.subr.bf16.mxu0 0
        %915 = vmatpush1.bf16.xpose.msra.mxu0 0
        %916 = vmatprep.mubr.bf16.mxu0 0
        %917 = vmatmul.mubr.bf16.gmra.mrb[0].mxu0 %v837
        %v918 = vpop.f32.mrb[0].mxu0
        %v919 = vadd.f32 0.0, %v918
        %v920 = vpop.f32.mrb[0].mxu0
        %v921 = vpop.f32.mrb[0].mxu0
        %v922 = vadd.f32 0.0, %v921
        %v923 = vpop.f32.mrb[0].mxu0
        %924 = vmatprep.mubr.bf16.mxu0 0
        %925 = vmatmul.mubr.bf16.gmra.mrb[0].mxu0 %v840
        %v926 = vpop.f32.mrb[0].mxu0
        %v927 = vadd.f32 0.0, %v926
        %v928 = vpop.f32.mrb[0].mxu0
        %v929 = vpop.f32.mrb[0].mxu0
        %v930 = vadd.f32 0.0, %v929
        %v931 = vpop.f32.mrb[0].mxu0
        %932 = vmatprep.mubr.bf16.mxu0 0
        %933 = vmatmul.mubr.bf16.gmra.mrb[0].mxu0 %v843
        %v934 = vpop.f32.mrb[0].mxu0
        %v935 = vadd.f32 0.0, %v934
        %v936 = vpop.f32.mrb[0].mxu0
        %v937 = vpop.f32.mrb[0].mxu0
        %v938 = vadd.f32 0.0, %v937
        %v939 = vpop.f32.mrb[0].mxu0
        %940 = vmatprep.mubr.bf16.mxu0 0
        %941 = vmatmul.mubr.bf16.gmra.mrb[0].mxu0 %v846
        %v942 = vpop.f32.mrb[0].mxu0
        %v943 = vadd.f32 0.0, %v942
        %v944 = vpop.f32.mrb[0].mxu0
        %v945 = vpop.f32.mrb[0].mxu0
        %v946 = vadd.f32 0.0, %v945
        %v947 = vpop.f32.mrb[0].mxu0
        %948 = vmatprep.mubr.bf16.mxu0 0
        %949 = vmatmul.mubr.bf16.gmra.mrb[0].mxu0 %v849
        %v950 = vpop.f32.mrb[0].mxu0
        %v951 = vadd.f32 0.0, %v950
        %v952 = vpop.f32.mrb[0].mxu0
        %v953 = vpop.f32.mrb[0].mxu0
        %v954 = vadd.f32 0.0, %v953
        %v955 = vpop.f32.mrb[0].mxu0
        %956 = vmatprep.mubr.bf16.mxu0 0
        %957 = vmatmul.mubr.bf16.gmra.mrb[0].mxu0 %v852
        %v958 = vpop.f32.mrb[0].mxu0
        %v959 = vadd.f32 0.0, %v958
        %v960 = vpop.f32.mrb[0].mxu0
        %v961 = vpop.f32.mrb[0].mxu0
        %v962 = vadd.f32 0.0, %v961
        %v963 = vpop.f32.mrb[0].mxu0
        %964 = vmatprep.mubr.bf16.mxu0 0
        %965 = vmatmul.mubr.bf16.gmra.mrb[0].mxu0 %v855
        %v966 = vpop.f32.mrb[0].mxu0
        %v967 = vadd.f32 0.0, %v966
        %v968 = vpop.f32.mrb[0].mxu0
        %v969 = vpop.f32.mrb[0].mxu0
        %v970 = vadd.f32 0.0, %v969
        %v971 = vpop.f32.mrb[0].mxu0
        %972 = vmatprep.mubr.bf16.mxu0 0
        %973 = vmatmul.mubr.bf16.gmra.mrb[0].mxu0 %v858
        %v974 = vpop.f32.mrb[0].mxu0
        %v975 = vadd.f32 0.0, %v974
        %v976 = vpop.f32.mrb[0].mxu0
        %v977 = vpop.f32.mrb[0].mxu0
        %v978 = vadd.f32 0.0, %v977
        %v979 = vpop.f32.mrb[0].mxu0
        %980 = vdwg.mxu0
        %981 = vmax.xlane.f32.xlu0 %v919
        %v982 = vpop.xlane.xlu0 %981
        %983 = vmax.xlane.f32.xlu0 %v922
        %v984 = vpop.xlane.xlu0 %983
        %985 = vmax.xlane.f32.xlu0 %v927
        %v986 = vpop.xlane.xlu0 %985
        %987 = vmax.xlane.f32.xlu0 %v930
        %v988 = vpop.xlane.xlu0 %987
        %989 = vmax.xlane.f32.xlu0 %v935
        %v990 = vpop.xlane.xlu0 %989
        %991 = vmax.xlane.f32.xlu0 %v938
        %v992 = vpop.xlane.xlu0 %991
        %993 = vmax.xlane.f32.xlu0 %v943
        %v994 = vpop.xlane.xlu0 %993
        %995 = vmax.xlane.f32.xlu0 %v946
        %v996 = vpop.xlane.xlu0 %995
        %997 = vmax.xlane.f32.xlu0 %v951
        %v998 = vpop.xlane.xlu0 %997
        %999 = vmax.xlane.f32.xlu0 %v954
        %v1000 = vpop.xlane.xlu0 %999
        %1001 = vmax.xlane.f32.xlu0 %v959
        %v1002 = vpop.xlane.xlu0 %1001
        %1003 = vmax.xlane.f32.xlu0 %v962
        %v1004 = vpop.xlane.xlu0 %1003
        %1005 = vmax.xlane.f32.xlu0 %v967
        %v1006 = vpop.xlane.xlu0 %1005
        %1007 = vmax.xlane.f32.xlu0 %v970
        %v1008 = vpop.xlane.xlu0 %1007
        %1009 = vmax.xlane.f32.xlu0 %v975
        %v1010 = vpop.xlane.xlu0 %1009
        %1011 = vmax.xlane.f32.xlu0 %v978
        %v1012 = vpop.xlane.xlu0 %1011
        %v1013 = vsub.f32 %v919, %v982
        %v1014 = vsub.f32 %v922, %v984
        %v1015 = vsub.f32 %v927, %v986
        %v1016 = vsub.f32 %v930, %v988
        %v1017 = vsub.f32 %v935, %v990
        %v1018 = vsub.f32 %v938, %v992
        %v1019 = vsub.f32 %v943, %v994
        %v1020 = vsub.f32 %v946, %v996
        %v1021 = vsub.f32 %v951, %v998
        %v1022 = vsub.f32 %v954, %v1000
        %v1023 = vsub.f32 %v959, %v1002
        %v1024 = vsub.f32 %v962, %v1004
        %v1025 = vsub.f32 %v967, %v1006
        %v1026 = vsub.f32 %v970, %v1008
        %v1027 = vsub.f32 %v975, %v1010
        %v1028 = vsub.f32 %v978, %v1012
        %v1029 = vmul.f32 %v1013, 1.442695
        %v1030 = vpow.pop %v1029
        %v1031 = vmul.f32 %v1014, 1.442695
        %v1032 = vpow.pop %v1031
        %v1033 = vmul.f32 %v1015, 1.442695
        %v1034 = vpow.pop %v1033
        %v1035 = vmul.f32 %v1016, 1.442695
        %v1036 = vpow.pop %v1035
        %v1037 = vmul.f32 %v1017, 1.442695
        %v1038 = vpow.pop %v1037
        %v1039 = vmul.f32 %v1018, 1.442695
        %v1040 = vpow.pop %v1039
        %v1041 = vmul.f32 %v1019, 1.442695
        %v1042 = vpow.pop %v1041
        %v1043 = vmul.f32 %v1020, 1.442695
        %v1044 = vpow.pop %v1043
        %v1045 = vmul.f32 %v1021, 1.442695
        %v1046 = vpow.pop %v1045
        %v1047 = vmul.f32 %v1022, 1.442695
        %v1048 = vpow.pop %v1047
        %v1049 = vmul.f32 %v1023, 1.442695
        %v1050 = vpow.pop %v1049
        %v1051 = vmul.f32 %v1024, 1.442695
        %v1052 = vpow.pop %v1051
        %v1053 = vmul.f32 %v1025, 1.442695
        %v1054 = vpow.pop %v1053
        %v1055 = vmul.f32 %v1026, 1.442695
        %v1056 = vpow.pop %v1055
        %v1057 = vmul.f32 %v1027, 1.442695
        %v1058 = vpow.pop %v1057
        %v1059 = vmul.f32 %v1028, 1.442695
        %v1060 = vpow.pop %v1059
        %1061 = vadd.xlane.f32.xlu0 %v1030
        %v1062 = vpop.xlane.xlu0 %1061
        %1063 = vadd.xlane.f32.xlu0 %v1032
        %v1064 = vpop.xlane.xlu0 %1063
        %1065 = vadd.xlane.f32.xlu0 %v1034
        %v1066 = vpop.xlane.xlu0 %1065
        %1067 = vadd.xlane.f32.xlu0 %v1036
        %v1068 = vpop.xlane.xlu0 %1067
        %1069 = vadd.xlane.f32.xlu0 %v1038
        %v1070 = vpop.xlane.xlu0 %1069
        %1071 = vadd.xlane.f32.xlu0 %v1040
        %v1072 = vpop.xlane.xlu0 %1071
        %1073 = vadd.xlane.f32.xlu0 %v1042
        %v1074 = vpop.xlane.xlu0 %1073
        %1075 = vadd.xlane.f32.xlu0 %v1044
        %v1076 = vpop.xlane.xlu0 %1075
        %1077 = vadd.xlane.f32.xlu0 %v1046
        %v1078 = vpop.xlane.xlu0 %1077
        %1079 = vadd.xlane.f32.xlu0 %v1048
        %v1080 = vpop.xlane.xlu0 %1079
        %1081 = vadd.xlane.f32.xlu0 %v1050
        %v1082 = vpop.xlane.xlu0 %1081
        %1083 = vadd.xlane.f32.xlu0 %v1052
        %v1084 = vpop.xlane.xlu0 %1083
        %1085 = vadd.xlane.f32.xlu0 %v1054
        %v1086 = vpop.xlane.xlu0 %1085
        %1087 = vadd.xlane.f32.xlu0 %v1056
        %v1088 = vpop.xlane.xlu0 %1087
        %1089 = vadd.xlane.f32.xlu0 %v1058
        %v1090 = vpop.xlane.xlu0 %1089
        %1091 = vadd.xlane.f32.xlu0 %v1060
        %v1092 = vpop.xlane.xlu0 %1091
        %v1093 = vpack.c.bf16 %v1032, %v1030
        %v1094 = vpack.c.bf16 %v1036, %v1034
        %v1095 = vpack.c.bf16 %v1040, %v1038
        %v1096 = vpack.c.bf16 %v1044, %v1042
        %v1097 = vpack.c.bf16 %v1048, %v1046
        %v1098 = vpack.c.bf16 %v1052, %v1050
        %v1099 = vpack.c.bf16 %v1056, %v1054
        %v1100 = vpack.c.bf16 %v1060, %v1058
        %1109 = vrot.lane.b32.xlu0 %v780, 96
        %v1110 = vpop.permute.xlu0 %1109
        %1111 = vrot.lane.b32.xlu0 %v781, 96
        %v1112 = vpop.permute.xlu0 %1111
        %1113 = vrot.lane.b32.xlu0 %v782, 96
        %v1114 = vpop.permute.xlu0 %1113
        %1115 = vrot.lane.b32.xlu0 %v783, 96
        %v1116 = vpop.permute.xlu0 %1115
        %1117 = vrot.lane.b32.xlu0 %v784, 96
        %v1118 = vpop.permute.xlu0 %1117
        %1119 = vrot.lane.b32.xlu0 %v785, 96
        %v1120 = vpop.permute.xlu0 %1119
        %1121 = vrot.lane.b32.xlu0 %v786, 96
        %v1122 = vpop.permute.xlu0 %1121
        %1123 = vrot.lane.b32.xlu0 %v787, 96
        %v1124 = vpop.permute.xlu0 %1123
        %1133 = vmatprep.subr.bf16.mxu0 0
        %1134 = vmatpush1.bf16.msra.mxu0 %v1110
        %1135 = vmatprep.subr.bf16.mxu0 0
        %1136 = vmatpush1.bf16.msra.mxu0 %v1112
        %1137 = vmatprep.subr.bf16.mxu0 0
        %1138 = vmatpush1.bf16.msra.mxu0 %v1114
        %1139 = vmatprep.subr.bf16.mxu0 0
        %1140 = vmatpush1.bf16.msra.mxu0 %v1116
        %1141 = vmatprep.subr.bf16.mxu0 0
        %1142 = vmatpush1.bf16.msra.mxu0 %v1118
        %1143 = vmatprep.subr.bf16.mxu0 0
        %1144 = vmatpush1.bf16.msra.mxu0 %v1120
        %1145 = vmatprep.subr.bf16.mxu0 0
        %1146 = vmatpush1.bf16.msra.mxu0 %v1122
        %1147 = vmatprep.subr.bf16.mxu0 0
        %1148 = vmatpush1.bf16.msra.mxu0 %v1124
        %1149 = vmatprep.subr.bf16.mxu0 0
        %1150 = vmatpush1.bf16.msra.mxu0 0
        %1151 = vmatprep.subr.bf16.mxu0 0
        %1152 = vmatpush1.bf16.msra.mxu0 0
        %1153 = vmatprep.subr.bf16.mxu0 0
        %1154 = vmatpush1.bf16.msra.mxu0 0
        %1155 = vmatprep.subr.bf16.mxu0 0
        %1156 = vmatpush1.bf16.msra.mxu0 0
        %1157 = vmatprep.subr.bf16.mxu0 0
        %1158 = vmatpush1.bf16.msra.mxu0 0
        %1159 = vmatprep.subr.bf16.mxu0 0
        %1160 = vmatpush1.bf16.msra.mxu0 0
        %1161 = vmatprep.subr.bf16.mxu0 0
        %1162 = vmatpush1.bf16.msra.mxu0 0
        %1163 = vmatprep.subr.bf16.mxu0 0
        %1164 = vmatpush1.bf16.msra.mxu0 0
        %1165 = vmatprep.mubr.bf16.mxu0 0
        %1166 = vmatmul.mubr.bf16.gmra.mrb[0].mxu0 %v1093
        %v1167 = vpop.f32.mrb[0].mxu0
        %v1168 = vadd.f32 0.0, %v1167
        %v1169 = vpop.f32.mrb[0].mxu0
        %v1170 = vpop.f32.mrb[0].mxu0
        %v1171 = vadd.f32 0.0, %v1170
        %v1172 = vpop.f32.mrb[0].mxu0
        %1173 = vmatprep.mubr.bf16.mxu0 0
        %1174 = vmatmul.mubr.bf16.gmra.mrb[0].mxu0 %v1094
        %v1175 = vpop.f32.mrb[0].mxu0
        %v1176 = vadd.f32 0.0, %v1175
        %v1177 = vpop.f32.mrb[0].mxu0
        %v1178 = vpop.f32.mrb[0].mxu0
        %v1179 = vadd.f32 0.0, %v1178
        %v1180 = vpop.f32.mrb[0].mxu0
        %1181 = vmatprep.mubr.bf16.mxu0 0
        %1182 = vmatmul.mubr.bf16.gmra.mrb[0].mxu0 %v1095
        %v1183 = vpop.f32.mrb[0].mxu0
        %v1184 = vadd.f32 0.0, %v1183
        %v1185 = vpop.f32.mrb[0].mxu0
        %v1186 = vpop.f32.mrb[0].mxu0
        %v1187 = vadd.f32 0.0, %v1186
        %v1188 = vpop.f32.mrb[0].mxu0
        %1189 = vmatprep.mubr.bf16.mxu0 0
        %1190 = vmatmul.mubr.bf16.gmra.mrb[0].mxu0 %v1096
        %v1191 = vpop.f32.mrb[0].mxu0
        %v1192 = vadd.f32 0.0, %v1191
        %v1193 = vpop.f32.mrb[0].mxu0
        %v1194 = vpop.f32.mrb[0].mxu0
        %v1195 = vadd.f32 0.0, %v1194
        %v1196 = vpop.f32.mrb[0].mxu0
        %1197 = vmatprep.mubr.bf16.mxu0 0
        %1198 = vmatmul.mubr.bf16.gmra.mrb[0].mxu0 %v1097
        %v1199 = vpop.f32.mrb[0].mxu0
        %v1200 = vadd.f32 0.0, %v1199
        %v1201 = vpop.f32.mrb[0].mxu0
        %v1202 = vpop.f32.mrb[0].mxu0
        %v1203 = vadd.f32 0.0, %v1202
        %v1204 = vpop.f32.mrb[0].mxu0
        %1205 = vmatprep.mubr.bf16.mxu0 0
        %1206 = vmatmul.mubr.bf16.gmra.mrb[0].mxu0 %v1098
        %v1207 = vpop.f32.mrb[0].mxu0
        %v1208 = vadd.f32 0.0, %v1207
        %v1209 = vpop.f32.mrb[0].mxu0
        %v1210 = vpop.f32.mrb[0].mxu0
        %v1211 = vadd.f32 0.0, %v1210
        %v1212 = vpop.f32.mrb[0].mxu0
        %1213 = vmatprep.mubr.bf16.mxu0 0
        %1214 = vmatmul.mubr.bf16.gmra.mrb[0].mxu0 %v1099
        %v1215 = vpop.f32.mrb[0].mxu0
        %v1216 = vadd.f32 0.0, %v1215
        %v1217 = vpop.f32.mrb[0].mxu0
        %v1218 = vpop.f32.mrb[0].mxu0
        %v1219 = vadd.f32 0.0, %v1218
        %v1220 = vpop.f32.mrb[0].mxu0
        %1221 = vmatprep.mubr.bf16.mxu0 0
        %1222 = vmatmul.mubr.bf16.gmra.mrb[0].mxu0 %v1100
        %v1223 = vpop.f32.mrb[0].mxu0
        %v1224 = vadd.f32 0.0, %v1223
        %v1225 = vpop.f32.mrb[0].mxu0
        %v1226 = vpop.f32.mrb[0].mxu0
        %v1227 = vadd.f32 0.0, %v1226
        %v1228 = vpop.f32.mrb[0].mxu0
        %1229 = vdwg.mxu0
        %v1230 = vrcp.pop %v1062
        %v1231 = vrcp.pop %v1064
        %v1232 = vrcp.pop %v1066
        %v1233 = vrcp.pop %v1068
        %v1234 = vrcp.pop %v1070
        %v1235 = vrcp.pop %v1072
        %v1236 = vrcp.pop %v1074
        %v1237 = vrcp.pop %v1076
        %v1238 = vrcp.pop %v1078
        %v1239 = vrcp.pop %v1080
        %v1240 = vrcp.pop %v1082
        %v1241 = vrcp.pop %v1084
        %v1242 = vrcp.pop %v1086
        %v1243 = vrcp.pop %v1088
        %v1244 = vrcp.pop %v1090
        %v1245 = vrcp.pop %v1092
        %v1246 = vmul.f32 %v1168, %v1230
        %v1247 = vmul.f32 %v1171, %v1231
        %v1248 = vmul.f32 %v1176, %v1232
        %v1249 = vmul.f32 %v1179, %v1233
        %v1250 = vmul.f32 %v1184, %v1234
        %v1251 = vmul.f32 %v1187, %v1235
        %v1252 = vmul.f32 %v1192, %v1236
        %v1253 = vmul.f32 %v1195, %v1237
        %v1254 = vmul.f32 %v1200, %v1238
        %v1255 = vmul.f32 %v1203, %v1239
        %v1256 = vmul.f32 %v1208, %v1240
        %v1257 = vmul.f32 %v1211, %v1241
        %v1258 = vmul.f32 %v1216, %v1242
        %v1259 = vmul.f32 %v1219, %v1243
        %v1260 = vmul.f32 %v1224, %v1244
        %v1261 = vmul.f32 %v1227, %v1245
        %1278 = vrot.lane.b32.xlu0 %v1246, 32
        %v1279 = vpop.permute.xlu0 %1278
        %1280 = vrot.lane.b32.xlu0 %v1247, 32
        %v1281 = vpop.permute.xlu0 %1280
        %1282 = vrot.lane.b32.xlu0 %v1248, 32
        %v1283 = vpop.permute.xlu0 %1282
        %1284 = vrot.lane.b32.xlu0 %v1249, 32
        %v1285 = vpop.permute.xlu0 %1284
        %1286 = vrot.lane.b32.xlu0 %v1250, 32
        %v1287 = vpop.permute.xlu0 %1286
        %1288 = vrot.lane.b32.xlu0 %v1251, 32
        %v1289 = vpop.permute.xlu0 %1288
        %1290 = vrot.lane.b32.xlu0 %v1252, 32
        %v1291 = vpop.permute.xlu0 %1290
        %1292 = vrot.lane.b32.xlu0 %v1253, 32
        %v1293 = vpop.permute.xlu0 %1292
        %1294 = vrot.lane.b32.xlu0 %v1254, 32
        %v1295 = vpop.permute.xlu0 %1294
        %1296 = vrot.lane.b32.xlu0 %v1255, 32
        %v1297 = vpop.permute.xlu0 %1296
        %1298 = vrot.lane.b32.xlu0 %v1256, 32
        %v1299 = vpop.permute.xlu0 %1298
        %1300 = vrot.lane.b32.xlu0 %v1257, 32
        %v1301 = vpop.permute.xlu0 %1300
        %1302 = vrot.lane.b32.xlu0 %v1258, 32
        %v1303 = vpop.permute.xlu0 %1302
        %1304 = vrot.lane.b32.xlu0 %v1259, 32
        %v1305 = vpop.permute.xlu0 %1304
        %1306 = vrot.lane.b32.xlu0 %v1260, 32
        %v1307 = vpop.permute.xlu0 %1306
        %1308 = vrot.lane.b32.xlu0 %v1261, 32
        %v1309 = vpop.permute.xlu0 %1308
        %vm1326 = vcmask 523520
        %1327 = vst.msk [vmem:[%s218] sm:$0xff] %vm1326, %v1279
        %1328 = vst.msk [vmem:[%s218 + $0x8] sm:$0xff] %vm1326, %v1281
        %1329 = vst.msk [vmem:[%s218 + $0x10] sm:$0xff] %vm1326, %v1283
        %1330 = vst.msk [vmem:[%s218 + $0x18] sm:$0xff] %vm1326, %v1285
        %1331 = vst.msk [vmem:[%s218 + $0x20] sm:$0xff] %vm1326, %v1287
        %1332 = vst.msk [vmem:[%s218 + $0x28] sm:$0xff] %vm1326, %v1289
        %1333 = vst.msk [vmem:[%s218 + $0x30] sm:$0xff] %vm1326, %v1291
        %1334 = vst.msk [vmem:[%s218 + $0x38] sm:$0xff] %vm1326, %v1293
        %1335 = vst.msk [vmem:[%s218 + $0x40] sm:$0xff] %vm1326, %v1295
        %1336 = vst.msk [vmem:[%s218 + $0x48] sm:$0xff] %vm1326, %v1297
        %1337 = vst.msk [vmem:[%s218 + $0x50] sm:$0xff] %vm1326, %v1299
        %1338 = vst.msk [vmem:[%s218 + $0x58] sm:$0xff] %vm1326, %v1301
        %1339 = vst.msk [vmem:[%s218 + $0x60] sm:$0xff] %vm1326, %v1303
        %1340 = vst.msk [vmem:[%s218 + $0x68] sm:$0xff] %vm1326, %v1305
        %1341 = vst.msk [vmem:[%s218 + $0x70] sm:$0xff] %vm1326, %v1307
        %1342 = vst.msk [vmem:[%s218 + $0x78] sm:$0xff] %vm1326, %v1309
        %v1343 = vld [vmem:[%s233] sm:$0xff]
        %v1344 = vld [vmem:[%s233 + $0x8] sm:$0xff]
        %v1345 = vld [vmem:[%s233 + $0x10] sm:$0xff]
        %v1346 = vld [vmem:[%s233 + $0x18] sm:$0xff]
        %v1347 = vld [vmem:[%s233 + $0x20] sm:$0xff]
        %v1348 = vld [vmem:[%s233 + $0x28] sm:$0xff]
        %v1349 = vld [vmem:[%s233 + $0x30] sm:$0xff]
        %v1350 = vld [vmem:[%s233 + $0x38] sm:$0xff]
        %v1351 = vld [vmem:[%s233 + $0x40] sm:$0xff]
        %v1352 = vld [vmem:[%s233 + $0x48] sm:$0xff]
        %v1353 = vld [vmem:[%s233 + $0x50] sm:$0xff]
        %v1354 = vld [vmem:[%s233 + $0x58] sm:$0xff]
        %v1355 = vld [vmem:[%s233 + $0x60] sm:$0xff]
        %v1356 = vld [vmem:[%s233 + $0x68] sm:$0xff]
        %v1357 = vld [vmem:[%s233 + $0x70] sm:$0xff]
        %v1358 = vld [vmem:[%s233 + $0x78] sm:$0xff]
        %v1359 = vpack.c.bf16 %v1344, %v1343
        %v1360 = vpack.c.bf16 %v1346, %v1345
        %v1361 = vpack.c.bf16 %v1348, %v1347
        %v1362 = vpack.c.bf16 %v1350, %v1349
        %v1363 = vpack.c.bf16 %v1352, %v1351
        %v1364 = vpack.c.bf16 %v1354, %v1353
        %v1365 = vpack.c.bf16 %v1356, %v1355
        %v1366 = vpack.c.bf16 %v1358, %v1357
        %v1367 = vld [vmem:[%s238] sm:$0xff]
        %v1368 = vld [vmem:[%s238 + $0x8] sm:$0xff]
        %v1369 = vld [vmem:[%s238 + $0x10] sm:$0xff]
        %v1370 = vld [vmem:[%s238 + $0x18] sm:$0xff]
        %v1371 = vld [vmem:[%s238 + $0x20] sm:$0xff]
        %v1372 = vld [vmem:[%s238 + $0x28] sm:$0xff]
        %v1373 = vld [vmem:[%s238 + $0x30] sm:$0xff]
        %v1374 = vld [vmem:[%s238 + $0x38] sm:$0xff]
        %v1375 = vld [vmem:[%s238 + $0x40] sm:$0xff]
        %v1376 = vld [vmem:[%s238 + $0x48] sm:$0xff]
        %v1377 = vld [vmem:[%s238 + $0x50] sm:$0xff]
        %v1378 = vld [vmem:[%s238 + $0x58] sm:$0xff]
        %v1379 = vld [vmem:[%s238 + $0x60] sm:$0xff]
        %v1380 = vld [vmem:[%s238 + $0x68] sm:$0xff]
        %v1381 = vld [vmem:[%s238 + $0x70] sm:$0xff]
        %v1382 = vld [vmem:[%s238 + $0x78] sm:$0xff]
        %v1383 = vpack.c.bf16 %v1368, %v1367
        %v1384 = vpack.c.bf16 %v1370, %v1369
        %v1385 = vpack.c.bf16 %v1372, %v1371
        %v1386 = vpack.c.bf16 %v1374, %v1373
        %v1387 = vpack.c.bf16 %v1376, %v1375
        %v1388 = vpack.c.bf16 %v1378, %v1377
        %v1389 = vpack.c.bf16 %v1380, %v1379
        %v1390 = vpack.c.bf16 %v1382, %v1381
        %1391 = vrot.lane.b32.xlu0 %v273, 64
        %v1392 = vpop.permute.xlu0 %1391
        %1393 = vrot.lane.b32.xlu0 %v274, 64
        %v1394 = vpop.permute.xlu0 %1393
        %1395 = vrot.lane.b32.xlu0 %v275, 64
        %v1396 = vpop.permute.xlu0 %1395
        %1397 = vrot.lane.b32.xlu0 %v276, 64
        %v1398 = vpop.permute.xlu0 %1397
        %1399 = vrot.lane.b32.xlu0 %v277, 64
        %v1400 = vpop.permute.xlu0 %1399
        %1401 = vrot.lane.b32.xlu0 %v278, 64
        %v1402 = vpop.permute.xlu0 %1401
        %1403 = vrot.lane.b32.xlu0 %v279, 64
        %v1404 = vpop.permute.xlu0 %1403
        %1405 = vrot.lane.b32.xlu0 %v280, 64
        %v1406 = vpop.permute.xlu0 %1405
        %1415 = vrot.lane.b32.xlu0 %v1359, 64
        %v1416 = vpop.permute.xlu0 %1415
        %1417 = vrot.lane.b32.xlu0 %v1360, 64
        %v1418 = vpop.permute.xlu0 %1417
        %1419 = vrot.lane.b32.xlu0 %v1361, 64
        %v1420 = vpop.permute.xlu0 %1419
        %1421 = vrot.lane.b32.xlu0 %v1362, 64
        %v1422 = vpop.permute.xlu0 %1421
        %1423 = vrot.lane.b32.xlu0 %v1363, 64
        %v1424 = vpop.permute.xlu0 %1423
        %1425 = vrot.lane.b32.xlu0 %v1364, 64
        %v1426 = vpop.permute.xlu0 %1425
        %1427 = vrot.lane.b32.xlu0 %v1365, 64
        %v1428 = vpop.permute.xlu0 %1427
        %1429 = vrot.lane.b32.xlu0 %v1366, 64
        %v1430 = vpop.permute.xlu0 %1429
        %v1432 = vsel %vm329, %v1392, 0
        %v1435 = vsel %vm329, %v1394, 0
        %v1438 = vsel %vm329, %v1396, 0
        %v1441 = vsel %vm329, %v1398, 0
        %v1444 = vsel %vm329, %v1400, 0
        %v1447 = vsel %vm329, %v1402, 0
        %v1450 = vsel %vm329, %v1404, 0
        %v1453 = vsel %vm329, %v1406, 0
        %v1456 = vsel %vm329, %v1416, 0
        %v1459 = vsel %vm329, %v1418, 0
        %v1462 = vsel %vm329, %v1420, 0
        %v1465 = vsel %vm329, %v1422, 0
        %v1468 = vsel %vm329, %v1424, 0
        %v1471 = vsel %vm329, %v1426, 0
        %v1474 = vsel %vm329, %v1428, 0
        %v1477 = vsel %vm329, %v1430, 0
        %1479 = vmatprep.subr.bf16.mxu0 0
        %1480 = vmatpush1.bf16.xpose.msra.mxu0 %v1456
        %1481 = vmatprep.subr.bf16.mxu0 0
        %1482 = vmatpush1.bf16.xpose.msra.mxu0 %v1459
        %1483 = vmatprep.subr.bf16.mxu0 0
        %1484 = vmatpush1.bf16.xpose.msra.mxu0 %v1462
        %1485 = vmatprep.subr.bf16.mxu0 0
        %1486 = vmatpush1.bf16.xpose.msra.mxu0 %v1465
        %1487 = vmatprep.subr.bf16.mxu0 0
        %1488 = vmatpush1.bf16.xpose.msra.mxu0 %v1468
        %1489 = vmatprep.subr.bf16.mxu0 0
        %1490 = vmatpush1.bf16.xpose.msra.mxu0 %v1471
        %1491 = vmatprep.subr.bf16.mxu0 0
        %1492 = vmatpush1.bf16.xpose.msra.mxu0 %v1474
        %1493 = vmatprep.subr.bf16.mxu0 0
        %1494 = vmatpush1.bf16.xpose.msra.mxu0 %v1477
        %1495 = vmatprep.subr.bf16.mxu0 0
        %1496 = vmatpush1.bf16.xpose.msra.mxu0 0
        %1497 = vmatprep.subr.bf16.mxu0 0
        %1498 = vmatpush1.bf16.xpose.msra.mxu0 0
        %1499 = vmatprep.subr.bf16.mxu0 0
        %1500 = vmatpush1.bf16.xpose.msra.mxu0 0
        %1501 = vmatprep.subr.bf16.mxu0 0
        %1502 = vmatpush1.bf16.xpose.msra.mxu0 0
        %1503 = vmatprep.subr.bf16.mxu0 0
        %1504 = vmatpush1.bf16.xpose.msra.mxu0 0
        %1505 = vmatprep.subr.bf16.mxu0 0
        %1506 = vmatpush1.bf16.xpose.msra.mxu0 0
        %1507 = vmatprep.subr.bf16.mxu0 0
        %1508 = vmatpush1.bf16.xpose.msra.mxu0 0
        %1509 = vmatprep.subr.bf16.mxu0 0
        %1510 = vmatpush1.bf16.xpose.msra.mxu0 0
        %1511 = vmatprep.mubr.bf16.mxu0 0
        %1512 = vmatmul.mubr.bf16.gmra.mrb[0].mxu0 %v1432
        %v1513 = vpop.f32.mrb[0].mxu0
        %v1514 = vadd.f32 0.0, %v1513
        %v1515 = vpop.f32.mrb[0].mxu0
        %v1516 = vpop.f32.mrb[0].mxu0
        %v1517 = vadd.f32 0.0, %v1516
        %v1518 = vpop.f32.mrb[0].mxu0
        %1519 = vmatprep.mubr.bf16.mxu0 0
        %1520 = vmatmul.mubr.bf16.gmra.mrb[0].mxu0 %v1435
        %v1521 = vpop.f32.mrb[0].mxu0
        %v1522 = vadd.f32 0.0, %v1521
        %v1523 = vpop.f32.mrb[0].mxu0
        %v1524 = vpop.f32.mrb[0].mxu0
        %v1525 = vadd.f32 0.0, %v1524
        %v1526 = vpop.f32.mrb[0].mxu0
        %1527 = vmatprep.mubr.bf16.mxu0 0
        %1528 = vmatmul.mubr.bf16.gmra.mrb[0].mxu0 %v1438
        %v1529 = vpop.f32.mrb[0].mxu0
        %v1530 = vadd.f32 0.0, %v1529
        %v1531 = vpop.f32.mrb[0].mxu0
        %v1532 = vpop.f32.mrb[0].mxu0
        %v1533 = vadd.f32 0.0, %v1532
        %v1534 = vpop.f32.mrb[0].mxu0
        %1535 = vmatprep.mubr.bf16.mxu0 0
        %1536 = vmatmul.mubr.bf16.gmra.mrb[0].mxu0 %v1441
        %v1537 = vpop.f32.mrb[0].mxu0
        %v1538 = vadd.f32 0.0, %v1537
        %v1539 = vpop.f32.mrb[0].mxu0
        %v1540 = vpop.f32.mrb[0].mxu0
        %v1541 = vadd.f32 0.0, %v1540
        %v1542 = vpop.f32.mrb[0].mxu0
        %1543 = vmatprep.mubr.bf16.mxu0 0
        %1544 = vmatmul.mubr.bf16.gmra.mrb[0].mxu0 %v1444
        %v1545 = vpop.f32.mrb[0].mxu0
        %v1546 = vadd.f32 0.0, %v1545
        %v1547 = vpop.f32.mrb[0].mxu0
        %v1548 = vpop.f32.mrb[0].mxu0
        %v1549 = vadd.f32 0.0, %v1548
        %v1550 = vpop.f32.mrb[0].mxu0
        %1551 = vmatprep.mubr.bf16.mxu0 0
        %1552 = vmatmul.mubr.bf16.gmra.mrb[0].mxu0 %v1447
        %v1553 = vpop.f32.mrb[0].mxu0
        %v1554 = vadd.f32 0.0, %v1553
        %v1555 = vpop.f32.mrb[0].mxu0
        %v1556 = vpop.f32.mrb[0].mxu0
        %v1557 = vadd.f32 0.0, %v1556
        %v1558 = vpop.f32.mrb[0].mxu0
        %1559 = vmatprep.mubr.bf16.mxu0 0
        %1560 = vmatmul.mubr.bf16.gmra.mrb[0].mxu0 %v1450
        %v1561 = vpop.f32.mrb[0].mxu0
        %v1562 = vadd.f32 0.0, %v1561
        %v1563 = vpop.f32.mrb[0].mxu0
        %v1564 = vpop.f32.mrb[0].mxu0
        %v1565 = vadd.f32 0.0, %v1564
        %v1566 = vpop.f32.mrb[0].mxu0
        %1567 = vmatprep.mubr.bf16.mxu0 0
        %1568 = vmatmul.mubr.bf16.gmra.mrb[0].mxu0 %v1453
        %v1569 = vpop.f32.mrb[0].mxu0
        %v1570 = vadd.f32 0.0, %v1569
        %v1571 = vpop.f32.mrb[0].mxu0
        %v1572 = vpop.f32.mrb[0].mxu0
        %v1573 = vadd.f32 0.0, %v1572
        %v1574 = vpop.f32.mrb[0].mxu0
        %1575 = vdwg.mxu0
        %1576 = vmax.xlane.f32.xlu0 %v1514
        %v1577 = vpop.xlane.xlu0 %1576
        %1578 = vmax.xlane.f32.xlu0 %v1517
        %v1579 = vpop.xlane.xlu0 %1578
        %1580 = vmax.xlane.f32.xlu0 %v1522
        %v1581 = vpop.xlane.xlu0 %1580
        %1582 = vmax.xlane.f32.xlu0 %v1525
        %v1583 = vpop.xlane.xlu0 %1582
        %1584 = vmax.xlane.f32.xlu0 %v1530
        %v1585 = vpop.xlane.xlu0 %1584
        %1586 = vmax.xlane.f32.xlu0 %v1533
        %v1587 = vpop.xlane.xlu0 %1586
        %1588 = vmax.xlane.f32.xlu0 %v1538
        %v1589 = vpop.xlane.xlu0 %1588
        %1590 = vmax.xlane.f32.xlu0 %v1541
        %v1591 = vpop.xlane.xlu0 %1590
        %1592 = vmax.xlane.f32.xlu0 %v1546
        %v1593 = vpop.xlane.xlu0 %1592
        %1594 = vmax.xlane.f32.xlu0 %v1549
        %v1595 = vpop.xlane.xlu0 %1594
        %1596 = vmax.xlane.f32.xlu0 %v1554
        %v1597 = vpop.xlane.xlu0 %1596
        %1598 = vmax.xlane.f32.xlu0 %v1557
        %v1599 = vpop.xlane.xlu0 %1598
        %1600 = vmax.xlane.f32.xlu0 %v1562
        %v1601 = vpop.xlane.xlu0 %1600
        %1602 = vmax.xlane.f32.xlu0 %v1565
        %v1603 = vpop.xlane.xlu0 %1602
        %1604 = vmax.xlane.f32.xlu0 %v1570
        %v1605 = vpop.xlane.xlu0 %1604
        %1606 = vmax.xlane.f32.xlu0 %v1573
        %v1607 = vpop.xlane.xlu0 %1606
        %v1608 = vsub.f32 %v1514, %v1577
        %v1609 = vsub.f32 %v1517, %v1579
        %v1610 = vsub.f32 %v1522, %v1581
        %v1611 = vsub.f32 %v1525, %v1583
        %v1612 = vsub.f32 %v1530, %v1585
        %v1613 = vsub.f32 %v1533, %v1587
        %v1614 = vsub.f32 %v1538, %v1589
        %v1615 = vsub.f32 %v1541, %v1591
        %v1616 = vsub.f32 %v1546, %v1593
        %v1617 = vsub.f32 %v1549, %v1595
        %v1618 = vsub.f32 %v1554, %v1597
        %v1619 = vsub.f32 %v1557, %v1599
        %v1620 = vsub.f32 %v1562, %v1601
        %v1621 = vsub.f32 %v1565, %v1603
        %v1622 = vsub.f32 %v1570, %v1605
        %v1623 = vsub.f32 %v1573, %v1607
        %v1624 = vmul.f32 %v1608, 1.442695
        %v1625 = vpow.pop %v1624
        %v1626 = vmul.f32 %v1609, 1.442695
        %v1627 = vpow.pop %v1626
        %v1628 = vmul.f32 %v1610, 1.442695
        %v1629 = vpow.pop %v1628
        %v1630 = vmul.f32 %v1611, 1.442695
        %v1631 = vpow.pop %v1630
        %v1632 = vmul.f32 %v1612, 1.442695
        %v1633 = vpow.pop %v1632
        %v1634 = vmul.f32 %v1613, 1.442695
        %v1635 = vpow.pop %v1634
        %v1636 = vmul.f32 %v1614, 1.442695
        %v1637 = vpow.pop %v1636
        %v1638 = vmul.f32 %v1615, 1.442695
        %v1639 = vpow.pop %v1638
        %v1640 = vmul.f32 %v1616, 1.442695
        %v1641 = vpow.pop %v1640
        %v1642 = vmul.f32 %v1617, 1.442695
        %v1643 = vpow.pop %v1642
        %v1644 = vmul.f32 %v1618, 1.442695
        %v1645 = vpow.pop %v1644
        %v1646 = vmul.f32 %v1619, 1.442695
        %v1647 = vpow.pop %v1646
        %v1648 = vmul.f32 %v1620, 1.442695
        %v1649 = vpow.pop %v1648
        %v1650 = vmul.f32 %v1621, 1.442695
        %v1651 = vpow.pop %v1650
        %v1652 = vmul.f32 %v1622, 1.442695
        %v1653 = vpow.pop %v1652
        %v1654 = vmul.f32 %v1623, 1.442695
        %v1655 = vpow.pop %v1654
        %1656 = vadd.xlane.f32.xlu0 %v1625
        %v1657 = vpop.xlane.xlu0 %1656
        %1658 = vadd.xlane.f32.xlu0 %v1627
        %v1659 = vpop.xlane.xlu0 %1658
        %1660 = vadd.xlane.f32.xlu0 %v1629
        %v1661 = vpop.xlane.xlu0 %1660
        %1662 = vadd.xlane.f32.xlu0 %v1631
        %v1663 = vpop.xlane.xlu0 %1662
        %1664 = vadd.xlane.f32.xlu0 %v1633
        %v1665 = vpop.xlane.xlu0 %1664
        %1666 = vadd.xlane.f32.xlu0 %v1635
        %v1667 = vpop.xlane.xlu0 %1666
        %1668 = vadd.xlane.f32.xlu0 %v1637
        %v1669 = vpop.xlane.xlu0 %1668
        %1670 = vadd.xlane.f32.xlu0 %v1639
        %v1671 = vpop.xlane.xlu0 %1670
        %1672 = vadd.xlane.f32.xlu0 %v1641
        %v1673 = vpop.xlane.xlu0 %1672
        %1674 = vadd.xlane.f32.xlu0 %v1643
        %v1675 = vpop.xlane.xlu0 %1674
        %1676 = vadd.xlane.f32.xlu0 %v1645
        %v1677 = vpop.xlane.xlu0 %1676
        %1678 = vadd.xlane.f32.xlu0 %v1647
        %v1679 = vpop.xlane.xlu0 %1678
        %1680 = vadd.xlane.f32.xlu0 %v1649
        %v1681 = vpop.xlane.xlu0 %1680
        %1682 = vadd.xlane.f32.xlu0 %v1651
        %v1683 = vpop.xlane.xlu0 %1682
        %1684 = vadd.xlane.f32.xlu0 %v1653
        %v1685 = vpop.xlane.xlu0 %1684
        %1686 = vadd.xlane.f32.xlu0 %v1655
        %v1687 = vpop.xlane.xlu0 %1686
        %v1688 = vpack.c.bf16 %v1627, %v1625
        %v1689 = vpack.c.bf16 %v1631, %v1629
        %v1690 = vpack.c.bf16 %v1635, %v1633
        %v1691 = vpack.c.bf16 %v1639, %v1637
        %v1692 = vpack.c.bf16 %v1643, %v1641
        %v1693 = vpack.c.bf16 %v1647, %v1645
        %v1694 = vpack.c.bf16 %v1651, %v1649
        %v1695 = vpack.c.bf16 %v1655, %v1653
        %1704 = vrot.lane.b32.xlu0 %v1383, 64
        %v1705 = vpop.permute.xlu0 %1704
        %1706 = vrot.lane.b32.xlu0 %v1384, 64
        %v1707 = vpop.permute.xlu0 %1706
        %1708 = vrot.lane.b32.xlu0 %v1385, 64
        %v1709 = vpop.permute.xlu0 %1708
        %1710 = vrot.lane.b32.xlu0 %v1386, 64
        %v1711 = vpop.permute.xlu0 %1710
        %1712 = vrot.lane.b32.xlu0 %v1387, 64
        %v1713 = vpop.permute.xlu0 %1712
        %1714 = vrot.lane.b32.xlu0 %v1388, 64
        %v1715 = vpop.permute.xlu0 %1714
        %1716 = vrot.lane.b32.xlu0 %v1389, 64
        %v1717 = vpop.permute.xlu0 %1716
        %1718 = vrot.lane.b32.xlu0 %v1390, 64
        %v1719 = vpop.permute.xlu0 %1718
        %1728 = vmatprep.subr.bf16.mxu0 0
        %1729 = vmatpush1.bf16.msra.mxu0 %v1705
        %1730 = vmatprep.subr.bf16.mxu0 0
        %1731 = vmatpush1.bf16.msra.mxu0 %v1707
        %1732 = vmatprep.subr.bf16.mxu0 0
        %1733 = vmatpush1.bf16.msra.mxu0 %v1709
        %1734 = vmatprep.subr.bf16.mxu0 0
        %1735 = vmatpush1.bf16.msra.mxu0 %v1711
        %1736 = vmatprep.subr.bf16.mxu0 0
        %1737 = vmatpush1.bf16.msra.mxu0 %v1713
        %1738 = vmatprep.subr.bf16.mxu0 0
        %1739 = vmatpush1.bf16.msra.mxu0 %v1715
        %1740 = vmatprep.subr.bf16.mxu0 0
        %1741 = vmatpush1.bf16.msra.mxu0 %v1717
        %1742 = vmatprep.subr.bf16.mxu0 0
        %1743 = vmatpush1.bf16.msra.mxu0 %v1719
        %1744 = vmatprep.subr.bf16.mxu0 0
        %1745 = vmatpush1.bf16.msra.mxu0 0
        %1746 = vmatprep.subr.bf16.mxu0 0
        %1747 = vmatpush1.bf16.msra.mxu0 0
        %1748 = vmatprep.subr.bf16.mxu0 0
        %1749 = vmatpush1.bf16.msra.mxu0 0
        %1750 = vmatprep.subr.bf16.mxu0 0
        %1751 = vmatpush1.bf16.msra.mxu0 0
        %1752 = vmatprep.subr.bf16.mxu0 0
        %1753 = vmatpush1.bf16.msra.mxu0 0
        %1754 = vmatprep.subr.bf16.mxu0 0
        %1755 = vmatpush1.bf16.msra.mxu0 0
        %1756 = vmatprep.subr.bf16.mxu0 0
        %1757 = vmatpush1.bf16.msra.mxu0 0
        %1758 = vmatprep.subr.bf16.mxu0 0
        %1759 = vmatpush1.bf16.msra.mxu0 0
        %1760 = vmatprep.mubr.bf16.mxu0 0
        %1761 = vmatmul.mubr.bf16.gmra.mrb[0].mxu0 %v1688
        %v1762 = vpop.f32.mrb[0].mxu0
        %v1763 = vadd.f32 0.0, %v1762
        %v1764 = vpop.f32.mrb[0].mxu0
        %v1765 = vpop.f32.mrb[0].mxu0
        %v1766 = vadd.f32 0.0, %v1765
        %v1767 = vpop.f32.mrb[0].mxu0
        %1768 = vmatprep.mubr.bf16.mxu0 0
        %1769 = vmatmul.mubr.bf16.gmra.mrb[0].mxu0 %v1689
        %v1770 = vpop.f32.mrb[0].mxu0
        %v1771 = vadd.f32 0.0, %v1770
        %v1772 = vpop.f32.mrb[0].mxu0
        %v1773 = vpop.f32.mrb[0].mxu0
        %v1774 = vadd.f32 0.0, %v1773
        %v1775 = vpop.f32.mrb[0].mxu0
        %1776 = vmatprep.mubr.bf16.mxu0 0
        %1777 = vmatmul.mubr.bf16.gmra.mrb[0].mxu0 %v1690
        %v1778 = vpop.f32.mrb[0].mxu0
        %v1779 = vadd.f32 0.0, %v1778
        %v1780 = vpop.f32.mrb[0].mxu0
        %v1781 = vpop.f32.mrb[0].mxu0
        %v1782 = vadd.f32 0.0, %v1781
        %v1783 = vpop.f32.mrb[0].mxu0
        %1784 = vmatprep.mubr.bf16.mxu0 0
        %1785 = vmatmul.mubr.bf16.gmra.mrb[0].mxu0 %v1691
        %v1786 = vpop.f32.mrb[0].mxu0
        %v1787 = vadd.f32 0.0, %v1786
        %v1788 = vpop.f32.mrb[0].mxu0
        %v1789 = vpop.f32.mrb[0].mxu0
        %v1790 = vadd.f32 0.0, %v1789
        %v1791 = vpop.f32.mrb[0].mxu0
        %1792 = vmatprep.mubr.bf16.mxu0 0
        %1793 = vmatmul.mubr.bf16.gmra.mrb[0].mxu0 %v1692
        %v1794 = vpop.f32.mrb[0].mxu0
        %v1795 = vadd.f32 0.0, %v1794
        %v1796 = vpop.f32.mrb[0].mxu0
        %v1797 = vpop.f32.mrb[0].mxu0
        %v1798 = vadd.f32 0.0, %v1797
        %v1799 = vpop.f32.mrb[0].mxu0
        %1800 = vmatprep.mubr.bf16.mxu0 0
        %1801 = vmatmul.mubr.bf16.gmra.mrb[0].mxu0 %v1693
        %v1802 = vpop.f32.mrb[0].mxu0
        %v1803 = vadd.f32 0.0, %v1802
        %v1804 = vpop.f32.mrb[0].mxu0
        %v1805 = vpop.f32.mrb[0].mxu0
        %v1806 = vadd.f32 0.0, %v1805
        %v1807 = vpop.f32.mrb[0].mxu0
        %1808 = vmatprep.mubr.bf16.mxu0 0
        %1809 = vmatmul.mubr.bf16.gmra.mrb[0].mxu0 %v1694
        %v1810 = vpop.f32.mrb[0].mxu0
        %v1811 = vadd.f32 0.0, %v1810
        %v1812 = vpop.f32.mrb[0].mxu0
        %v1813 = vpop.f32.mrb[0].mxu0
        %v1814 = vadd.f32 0.0, %v1813
        %v1815 = vpop.f32.mrb[0].mxu0
        %1816 = vmatprep.mubr.bf16.mxu0 0
        %1817 = vmatmul.mubr.bf16.gmra.mrb[0].mxu0 %v1695
        %v1818 = vpop.f32.mrb[0].mxu0
        %v1819 = vadd.f32 0.0, %v1818
        %v1820 = vpop.f32.mrb[0].mxu0
        %v1821 = vpop.f32.mrb[0].mxu0
        %v1822 = vadd.f32 0.0, %v1821
        %v1823 = vpop.f32.mrb[0].mxu0
        %1824 = vdwg.mxu0
        %v1825 = vrcp.pop %v1657
        %v1826 = vrcp.pop %v1659
        %v1827 = vrcp.pop %v1661
        %v1828 = vrcp.pop %v1663
        %v1829 = vrcp.pop %v1665
        %v1830 = vrcp.pop %v1667
        %v1831 = vrcp.pop %v1669
        %v1832 = vrcp.pop %v1671
        %v1833 = vrcp.pop %v1673
        %v1834 = vrcp.pop %v1675
        %v1835 = vrcp.pop %v1677
        %v1836 = vrcp.pop %v1679
        %v1837 = vrcp.pop %v1681
        %v1838 = vrcp.pop %v1683
        %v1839 = vrcp.pop %v1685
        %v1840 = vrcp.pop %v1687
        %v1841 = vmul.f32 %v1763, %v1825
        %v1842 = vmul.f32 %v1766, %v1826
        %v1843 = vmul.f32 %v1771, %v1827
        %v1844 = vmul.f32 %v1774, %v1828
        %v1845 = vmul.f32 %v1779, %v1829
        %v1846 = vmul.f32 %v1782, %v1830
        %v1847 = vmul.f32 %v1787, %v1831
        %v1848 = vmul.f32 %v1790, %v1832
        %v1849 = vmul.f32 %v1795, %v1833
        %v1850 = vmul.f32 %v1798, %v1834
        %v1851 = vmul.f32 %v1803, %v1835
        %v1852 = vmul.f32 %v1806, %v1836
        %v1853 = vmul.f32 %v1811, %v1837
        %v1854 = vmul.f32 %v1814, %v1838
        %v1855 = vmul.f32 %v1819, %v1839
        %v1856 = vmul.f32 %v1822, %v1840
        %1873 = vrot.lane.b32.xlu0 %v1841, 64
        %v1874 = vpop.permute.xlu0 %1873
        %1875 = vrot.lane.b32.xlu0 %v1842, 64
        %v1876 = vpop.permute.xlu0 %1875
        %1877 = vrot.lane.b32.xlu0 %v1843, 64
        %v1878 = vpop.permute.xlu0 %1877
        %1879 = vrot.lane.b32.xlu0 %v1844, 64
        %v1880 = vpop.permute.xlu0 %1879
        %1881 = vrot.lane.b32.xlu0 %v1845, 64
        %v1882 = vpop.permute.xlu0 %1881
        %1883 = vrot.lane.b32.xlu0 %v1846, 64
        %v1884 = vpop.permute.xlu0 %1883
        %1885 = vrot.lane.b32.xlu0 %v1847, 64
        %v1886 = vpop.permute.xlu0 %1885
        %1887 = vrot.lane.b32.xlu0 %v1848, 64
        %v1888 = vpop.permute.xlu0 %1887
        %1889 = vrot.lane.b32.xlu0 %v1849, 64
        %v1890 = vpop.permute.xlu0 %1889
        %1891 = vrot.lane.b32.xlu0 %v1850, 64
        %v1892 = vpop.permute.xlu0 %1891
        %1893 = vrot.lane.b32.xlu0 %v1851, 64
        %v1894 = vpop.permute.xlu0 %1893
        %1895 = vrot.lane.b32.xlu0 %v1852, 64
        %v1896 = vpop.permute.xlu0 %1895
        %1897 = vrot.lane.b32.xlu0 %v1853, 64
        %v1898 = vpop.permute.xlu0 %1897
        %1899 = vrot.lane.b32.xlu0 %v1854, 64
        %v1900 = vpop.permute.xlu0 %1899
        %1901 = vrot.lane.b32.xlu0 %v1855, 64
        %v1902 = vpop.permute.xlu0 %1901
        %1903 = vrot.lane.b32.xlu0 %v1856, 64
        %v1904 = vpop.permute.xlu0 %1903
        %vm1921 = vcmask 785920
        %1922 = vst.msk [vmem:[%s218] sm:$0xff] %vm1921, %v1874
        %1923 = vst.msk [vmem:[%s218 + $0x8] sm:$0xff] %vm1921, %v1876
        %1924 = vst.msk [vmem:[%s218 + $0x10] sm:$0xff] %vm1921, %v1878
        %1925 = vst.msk [vmem:[%s218 + $0x18] sm:$0xff] %vm1921, %v1880
        %1926 = vst.msk [vmem:[%s218 + $0x20] sm:$0xff] %vm1921, %v1882
        %1927 = vst.msk [vmem:[%s218 + $0x28] sm:$0xff] %vm1921, %v1884
        %1928 = vst.msk [vmem:[%s218 + $0x30] sm:$0xff] %vm1921, %v1886
        %1929 = vst.msk [vmem:[%s218 + $0x38] sm:$0xff] %vm1921, %v1888
        %1930 = vst.msk [vmem:[%s218 + $0x40] sm:$0xff] %vm1921, %v1890
        %1931 = vst.msk [vmem:[%s218 + $0x48] sm:$0xff] %vm1921, %v1892
        %1932 = vst.msk [vmem:[%s218 + $0x50] sm:$0xff] %vm1921, %v1894
        %1933 = vst.msk [vmem:[%s218 + $0x58] sm:$0xff] %vm1921, %v1896
        %1934 = vst.msk [vmem:[%s218 + $0x60] sm:$0xff] %vm1921, %v1898
        %1935 = vst.msk [vmem:[%s218 + $0x68] sm:$0xff] %vm1921, %v1900
        %1936 = vst.msk [vmem:[%s218 + $0x70] sm:$0xff] %vm1921, %v1902
        %1937 = vst.msk [vmem:[%s218 + $0x78] sm:$0xff] %vm1921, %v1904
        %v1938 = vld [vmem:[%s233] sm:$0xff]
        %v1939 = vld [vmem:[%s233 + $0x8] sm:$0xff]
        %v1940 = vld [vmem:[%s233 + $0x10] sm:$0xff]
        %v1941 = vld [vmem:[%s233 + $0x18] sm:$0xff]
        %v1942 = vld [vmem:[%s233 + $0x20] sm:$0xff]
        %v1943 = vld [vmem:[%s233 + $0x28] sm:$0xff]
        %v1944 = vld [vmem:[%s233 + $0x30] sm:$0xff]
        %v1945 = vld [vmem:[%s233 + $0x38] sm:$0xff]
        %v1946 = vld [vmem:[%s233 + $0x40] sm:$0xff]
        %v1947 = vld [vmem:[%s233 + $0x48] sm:$0xff]
        %v1948 = vld [vmem:[%s233 + $0x50] sm:$0xff]
        %v1949 = vld [vmem:[%s233 + $0x58] sm:$0xff]
        %v1950 = vld [vmem:[%s233 + $0x60] sm:$0xff]
        %v1951 = vld [vmem:[%s233 + $0x68] sm:$0xff]
        %v1952 = vld [vmem:[%s233 + $0x70] sm:$0xff]
        %v1953 = vld [vmem:[%s233 + $0x78] sm:$0xff]
        %v1954 = vpack.c.bf16 %v1939, %v1938
        %v1955 = vpack.c.bf16 %v1941, %v1940
        %v1956 = vpack.c.bf16 %v1943, %v1942
        %v1957 = vpack.c.bf16 %v1945, %v1944
        %v1958 = vpack.c.bf16 %v1947, %v1946
        %v1959 = vpack.c.bf16 %v1949, %v1948
        %v1960 = vpack.c.bf16 %v1951, %v1950
        %v1961 = vpack.c.bf16 %v1953, %v1952
        %v1962 = vld [vmem:[%s238] sm:$0xff]
        %v1963 = vld [vmem:[%s238 + $0x8] sm:$0xff]
        %v1964 = vld [vmem:[%s238 + $0x10] sm:$0xff]
        %v1965 = vld [vmem:[%s238 + $0x18] sm:$0xff]
        %v1966 = vld [vmem:[%s238 + $0x20] sm:$0xff]
        %v1967 = vld [vmem:[%s238 + $0x28] sm:$0xff]
        %v1968 = vld [vmem:[%s238 + $0x30] sm:$0xff]
        %v1969 = vld [vmem:[%s238 + $0x38] sm:$0xff]
        %v1970 = vld [vmem:[%s238 + $0x40] sm:$0xff]
        %v1971 = vld [vmem:[%s238 + $0x48] sm:$0xff]
        %v1972 = vld [vmem:[%s238 + $0x50] sm:$0xff]
        %v1973 = vld [vmem:[%s238 + $0x58] sm:$0xff]
        %v1974 = vld [vmem:[%s238 + $0x60] sm:$0xff]
        %v1975 = vld [vmem:[%s238 + $0x68] sm:$0xff]
        %v1976 = vld [vmem:[%s238 + $0x70] sm:$0xff]
        %v1977 = vld [vmem:[%s238 + $0x78] sm:$0xff]
        %v1978 = vpack.c.bf16 %v1963, %v1962
        %v1979 = vpack.c.bf16 %v1965, %v1964
        %v1980 = vpack.c.bf16 %v1967, %v1966
        %v1981 = vpack.c.bf16 %v1969, %v1968
        %v1982 = vpack.c.bf16 %v1971, %v1970
        %v1983 = vpack.c.bf16 %v1973, %v1972
        %v1984 = vpack.c.bf16 %v1975, %v1974
        %v1985 = vpack.c.bf16 %v1977, %v1976
        %1986 = vrot.lane.b32.xlu0 %v273, 32
        %v1987 = vpop.permute.xlu0 %1986
        %1988 = vrot.lane.b32.xlu0 %v274, 32
        %v1989 = vpop.permute.xlu0 %1988
        %1990 = vrot.lane.b32.xlu0 %v275, 32
        %v1991 = vpop.permute.xlu0 %1990
        %1992 = vrot.lane.b32.xlu0 %v276, 32
        %v1993 = vpop.permute.xlu0 %1992
        %1994 = vrot.lane.b32.xlu0 %v277, 32
        %v1995 = vpop.permute.xlu0 %1994
        %1996 = vrot.lane.b32.xlu0 %v278, 32
        %v1997 = vpop.permute.xlu0 %1996
        %1998 = vrot.lane.b32.xlu0 %v279, 32
        %v1999 = vpop.permute.xlu0 %1998
        %2000 = vrot.lane.b32.xlu0 %v280, 32
        %v2001 = vpop.permute.xlu0 %2000
        %2010 = vrot.lane.b32.xlu0 %v1954, 32
        %v2011 = vpop.permute.xlu0 %2010
        %2012 = vrot.lane.b32.xlu0 %v1955, 32
        %v2013 = vpop.permute.xlu0 %2012
        %2014 = vrot.lane.b32.xlu0 %v1956, 32
        %v2015 = vpop.permute.xlu0 %2014
        %2016 = vrot.lane.b32.xlu0 %v1957, 32
        %v2017 = vpop.permute.xlu0 %2016
        %2018 = vrot.lane.b32.xlu0 %v1958, 32
        %v2019 = vpop.permute.xlu0 %2018
        %2020 = vrot.lane.b32.xlu0 %v1959, 32
        %v2021 = vpop.permute.xlu0 %2020
        %2022 = vrot.lane.b32.xlu0 %v1960, 32
        %v2023 = vpop.permute.xlu0 %2022
        %2024 = vrot.lane.b32.xlu0 %v1961, 32
        %v2025 = vpop.permute.xlu0 %2024
        %v2027 = vsel %vm329, %v1987, 0
        %v2030 = vsel %vm329, %v1989, 0
        %v2033 = vsel %vm329, %v1991, 0
        %v2036 = vsel %vm329, %v1993, 0
        %v2039 = vsel %vm329, %v1995, 0
        %v2042 = vsel %vm329, %v1997, 0
        %v2045 = vsel %vm329, %v1999, 0
        %v2048 = vsel %vm329, %v2001, 0
        %v2051 = vsel %vm329, %v2011, 0
        %v2054 = vsel %vm329, %v2013, 0
        %v2057 = vsel %vm329, %v2015, 0
        %v2060 = vsel %vm329, %v2017, 0
        %v2063 = vsel %vm329, %v2019, 0
        %v2066 = vsel %vm329, %v2021, 0
        %v2069 = vsel %vm329, %v2023, 0
        %v2072 = vsel %vm329, %v2025, 0
        %2074 = vmatprep.subr.bf16.mxu0 0
        %2075 = vmatpush1.bf16.xpose.msra.mxu0 %v2051
        %2076 = vmatprep.subr.bf16.mxu0 0
        %2077 = vmatpush1.bf16.xpose.msra.mxu0 %v2054
        %2078 = vmatprep.subr.bf16.mxu0 0
        %2079 = vmatpush1.bf16.xpose.msra.mxu0 %v2057
        %2080 = vmatprep.subr.bf16.mxu0 0
        %2081 = vmatpush1.bf16.xpose.msra.mxu0 %v2060
        %2082 = vmatprep.subr.bf16.mxu0 0
        %2083 = vmatpush1.bf16.xpose.msra.mxu0 %v2063
        %2084 = vmatprep.subr.bf16.mxu0 0
        %2085 = vmatpush1.bf16.xpose.msra.mxu0 %v2066
        %2086 = vmatprep.subr.bf16.mxu0 0
        %2087 = vmatpush1.bf16.xpose.msra.mxu0 %v2069
        %2088 = vmatprep.subr.bf16.mxu0 0
        %2089 = vmatpush1.bf16.xpose.msra.mxu0 %v2072
        %2090 = vmatprep.subr.bf16.mxu0 0
        %2091 = vmatpush1.bf16.xpose.msra.mxu0 0
        %2092 = vmatprep.subr.bf16.mxu0 0
        %2093 = vmatpush1.bf16.xpose.msra.mxu0 0
        %2094 = vmatprep.subr.bf16.mxu0 0
        %2095 = vmatpush1.bf16.xpose.msra.mxu0 0
        %2096 = vmatprep.subr.bf16.mxu0 0
        %2097 = vmatpush1.bf16.xpose.msra.mxu0 0
        %2098 = vmatprep.subr.bf16.mxu0 0
        %2099 = vmatpush1.bf16.xpose.msra.mxu0 0
        %2100 = vmatprep.subr.bf16.mxu0 0
        %2101 = vmatpush1.bf16.xpose.msra.mxu0 0
        %2102 = vmatprep.subr.bf16.mxu0 0
        %2103 = vmatpush1.bf16.xpose.msra.mxu0 0
        %2104 = vmatprep.subr.bf16.mxu0 0
        %2105 = vmatpush1.bf16.xpose.msra.mxu0 0
        %2106 = vmatprep.mubr.bf16.mxu0 0
        %2107 = vmatmul.mubr.bf16.gmra.mrb[0].mxu0 %v2027
        %v2108 = vpop.f32.mrb[0].mxu0
        %v2109 = vadd.f32 0.0, %v2108
        %v2110 = vpop.f32.mrb[0].mxu0
        %v2111 = vpop.f32.mrb[0].mxu0
        %v2112 = vadd.f32 0.0, %v2111
        %v2113 = vpop.f32.mrb[0].mxu0
        %2114 = vmatprep.mubr.bf16.mxu0 0
        %2115 = vmatmul.mubr.bf16.gmra.mrb[0].mxu0 %v2030
        %v2116 = vpop.f32.mrb[0].mxu0
        %v2117 = vadd.f32 0.0, %v2116
        %v2118 = vpop.f32.mrb[0].mxu0
        %v2119 = vpop.f32.mrb[0].mxu0
        %v2120 = vadd.f32 0.0, %v2119
        %v2121 = vpop.f32.mrb[0].mxu0
        %2122 = vmatprep.mubr.bf16.mxu0 0
        %2123 = vmatmul.mubr.bf16.gmra.mrb[0].mxu0 %v2033
        %v2124 = vpop.f32.mrb[0].mxu0
        %v2125 = vadd.f32 0.0, %v2124
        %v2126 = vpop.f32.mrb[0].mxu0
        %v2127 = vpop.f32.mrb[0].mxu0
        %v2128 = vadd.f32 0.0, %v2127
        %v2129 = vpop.f32.mrb[0].mxu0
        %2130 = vmatprep.mubr.bf16.mxu0 0
        %2131 = vmatmul.mubr.bf16.gmra.mrb[0].mxu0 %v2036
        %v2132 = vpop.f32.mrb[0].mxu0
        %v2133 = vadd.f32 0.0, %v2132
        %v2134 = vpop.f32.mrb[0].mxu0
        %v2135 = vpop.f32.mrb[0].mxu0
        %v2136 = vadd.f32 0.0, %v2135
        %v2137 = vpop.f32.mrb[0].mxu0
        %2138 = vmatprep.mubr.bf16.mxu0 0
        %2139 = vmatmul.mubr.bf16.gmra.mrb[0].mxu0 %v2039
        %v2140 = vpop.f32.mrb[0].mxu0
        %v2141 = vadd.f32 0.0, %v2140
        %v2142 = vpop.f32.mrb[0].mxu0
        %v2143 = vpop.f32.mrb[0].mxu0
        %v2144 = vadd.f32 0.0, %v2143
        %v2145 = vpop.f32.mrb[0].mxu0
        %2146 = vmatprep.mubr.bf16.mxu0 0
        %2147 = vmatmul.mubr.bf16.gmra.mrb[0].mxu0 %v2042
        %v2148 = vpop.f32.mrb[0].mxu0
        %v2149 = vadd.f32 0.0, %v2148
        %v2150 = vpop.f32.mrb[0].mxu0
        %v2151 = vpop.f32.mrb[0].mxu0
        %v2152 = vadd.f32 0.0, %v2151
        %v2153 = vpop.f32.mrb[0].mxu0
        %2154 = vmatprep.mubr.bf16.mxu0 0
        %2155 = vmatmul.mubr.bf16.gmra.mrb[0].mxu0 %v2045
        %v2156 = vpop.f32.mrb[0].mxu0
        %v2157 = vadd.f32 0.0, %v2156
        %v2158 = vpop.f32.mrb[0].mxu0
        %v2159 = vpop.f32.mrb[0].mxu0
        %v2160 = vadd.f32 0.0, %v2159
        %v2161 = vpop.f32.mrb[0].mxu0
        %2162 = vmatprep.mubr.bf16.mxu0 0
        %2163 = vmatmul.mubr.bf16.gmra.mrb[0].mxu0 %v2048
        %v2164 = vpop.f32.mrb[0].mxu0
        %v2165 = vadd.f32 0.0, %v2164
        %v2166 = vpop.f32.mrb[0].mxu0
        %v2167 = vpop.f32.mrb[0].mxu0
        %v2168 = vadd.f32 0.0, %v2167
        %v2169 = vpop.f32.mrb[0].mxu0
        %2170 = vdwg.mxu0
        %2171 = vmax.xlane.f32.xlu0 %v2109
        %v2172 = vpop.xlane.xlu0 %2171
        %2173 = vmax.xlane.f32.xlu0 %v2112
        %v2174 = vpop.xlane.xlu0 %2173
        %2175 = vmax.xlane.f32.xlu0 %v2117
        %v2176 = vpop.xlane.xlu0 %2175
        %2177 = vmax.xlane.f32.xlu0 %v2120
        %v2178 = vpop.xlane.xlu0 %2177
        %2179 = vmax.xlane.f32.xlu0 %v2125
        %v2180 = vpop.xlane.xlu0 %2179
        %2181 = vmax.xlane.f32.xlu0 %v2128
        %v2182 = vpop.xlane.xlu0 %2181
        %2183 = vmax.xlane.f32.xlu0 %v2133
        %v2184 = vpop.xlane.xlu0 %2183
        %2185 = vmax.xlane.f32.xlu0 %v2136
        %v2186 = vpop.xlane.xlu0 %2185
        %2187 = vmax.xlane.f32.xlu0 %v2141
        %v2188 = vpop.xlane.xlu0 %2187
        %2189 = vmax.xlane.f32.xlu0 %v2144
        %v2190 = vpop.xlane.xlu0 %2189
        %2191 = vmax.xlane.f32.xlu0 %v2149
        %v2192 = vpop.xlane.xlu0 %2191
        %2193 = vmax.xlane.f32.xlu0 %v2152
        %v2194 = vpop.xlane.xlu0 %2193
        %2195 = vmax.xlane.f32.xlu0 %v2157
        %v2196 = vpop.xlane.xlu0 %2195
        %2197 = vmax.xlane.f32.xlu0 %v2160
        %v2198 = vpop.xlane.xlu0 %2197
        %2199 = vmax.xlane.f32.xlu0 %v2165
        %v2200 = vpop.xlane.xlu0 %2199
        %2201 = vmax.xlane.f32.xlu0 %v2168
        %v2202 = vpop.xlane.xlu0 %2201
        %v2203 = vsub.f32 %v2109, %v2172
        %v2204 = vsub.f32 %v2112, %v2174
        %v2205 = vsub.f32 %v2117, %v2176
        %v2206 = vsub.f32 %v2120, %v2178
        %v2207 = vsub.f32 %v2125, %v2180
        %v2208 = vsub.f32 %v2128, %v2182
        %v2209 = vsub.f32 %v2133, %v2184
        %v2210 = vsub.f32 %v2136, %v2186
        %v2211 = vsub.f32 %v2141, %v2188
        %v2212 = vsub.f32 %v2144, %v2190
        %v2213 = vsub.f32 %v2149, %v2192
        %v2214 = vsub.f32 %v2152, %v2194
        %v2215 = vsub.f32 %v2157, %v2196
        %v2216 = vsub.f32 %v2160, %v2198
        %v2217 = vsub.f32 %v2165, %v2200
        %v2218 = vsub.f32 %v2168, %v2202
        %v2219 = vmul.f32 %v2203, 1.442695
        %v2220 = vpow.pop %v2219
        %v2221 = vmul.f32 %v2204, 1.442695
        %v2222 = vpow.pop %v2221
        %v2223 = vmul.f32 %v2205, 1.442695
        %v2224 = vpow.pop %v2223
        %v2225 = vmul.f32 %v2206, 1.442695
        %v2226 = vpow.pop %v2225
        %v2227 = vmul.f32 %v2207, 1.442695
        %v2228 = vpow.pop %v2227
        %v2229 = vmul.f32 %v2208, 1.442695
        %v2230 = vpow.pop %v2229
        %v2231 = vmul.f32 %v2209, 1.442695
        %v2232 = vpow.pop %v2231
        %v2233 = vmul.f32 %v2210, 1.442695
        %v2234 = vpow.pop %v2233
        %v2235 = vmul.f32 %v2211, 1.442695
        %v2236 = vpow.pop %v2235
        %v2237 = vmul.f32 %v2212, 1.442695
        %v2238 = vpow.pop %v2237
        %v2239 = vmul.f32 %v2213, 1.442695
        %v2240 = vpow.pop %v2239
        %v2241 = vmul.f32 %v2214, 1.442695
        %v2242 = vpow.pop %v2241
        %v2243 = vmul.f32 %v2215, 1.442695
        %v2244 = vpow.pop %v2243
        %v2245 = vmul.f32 %v2216, 1.442695
        %v2246 = vpow.pop %v2245
        %v2247 = vmul.f32 %v2217, 1.442695
        %v2248 = vpow.pop %v2247
        %v2249 = vmul.f32 %v2218, 1.442695
        %v2250 = vpow.pop %v2249
        %2251 = vadd.xlane.f32.xlu0 %v2220
        %v2252 = vpop.xlane.xlu0 %2251
        %2253 = vadd.xlane.f32.xlu0 %v2222
        %v2254 = vpop.xlane.xlu0 %2253
        %2255 = vadd.xlane.f32.xlu0 %v2224
        %v2256 = vpop.xlane.xlu0 %2255
        %2257 = vadd.xlane.f32.xlu0 %v2226
        %v2258 = vpop.xlane.xlu0 %2257
        %2259 = vadd.xlane.f32.xlu0 %v2228
        %v2260 = vpop.xlane.xlu0 %2259
        %2261 = vadd.xlane.f32.xlu0 %v2230
        %v2262 = vpop.xlane.xlu0 %2261
        %2263 = vadd.xlane.f32.xlu0 %v2232
        %v2264 = vpop.xlane.xlu0 %2263
        %2265 = vadd.xlane.f32.xlu0 %v2234
        %v2266 = vpop.xlane.xlu0 %2265
        %2267 = vadd.xlane.f32.xlu0 %v2236
        %v2268 = vpop.xlane.xlu0 %2267
        %2269 = vadd.xlane.f32.xlu0 %v2238
        %v2270 = vpop.xlane.xlu0 %2269
        %2271 = vadd.xlane.f32.xlu0 %v2240
        %v2272 = vpop.xlane.xlu0 %2271
        %2273 = vadd.xlane.f32.xlu0 %v2242
        %v2274 = vpop.xlane.xlu0 %2273
        %2275 = vadd.xlane.f32.xlu0 %v2244
        %v2276 = vpop.xlane.xlu0 %2275
        %2277 = vadd.xlane.f32.xlu0 %v2246
        %v2278 = vpop.xlane.xlu0 %2277
        %2279 = vadd.xlane.f32.xlu0 %v2248
        %v2280 = vpop.xlane.xlu0 %2279
        %2281 = vadd.xlane.f32.xlu0 %v2250
        %v2282 = vpop.xlane.xlu0 %2281
        %v2283 = vpack.c.bf16 %v2222, %v2220
        %v2284 = vpack.c.bf16 %v2226, %v2224
        %v2285 = vpack.c.bf16 %v2230, %v2228
        %v2286 = vpack.c.bf16 %v2234, %v2232
        %v2287 = vpack.c.bf16 %v2238, %v2236
        %v2288 = vpack.c.bf16 %v2242, %v2240
        %v2289 = vpack.c.bf16 %v2246, %v2244
        %v2290 = vpack.c.bf16 %v2250, %v2248
        %2299 = vrot.lane.b32.xlu0 %v1978, 32
        %v2300 = vpop.permute.xlu0 %2299
        %2301 = vrot.lane.b32.xlu0 %v1979, 32
        %v2302 = vpop.permute.xlu0 %2301
        %2303 = vrot.lane.b32.xlu0 %v1980, 32
        %v2304 = vpop.permute.xlu0 %2303
        %2305 = vrot.lane.b32.xlu0 %v1981, 32
        %v2306 = vpop.permute.xlu0 %2305
        %2307 = vrot.lane.b32.xlu0 %v1982, 32
        %v2308 = vpop.permute.xlu0 %2307
        %2309 = vrot.lane.b32.xlu0 %v1983, 32
        %v2310 = vpop.permute.xlu0 %2309
        %2311 = vrot.lane.b32.xlu0 %v1984, 32
        %v2312 = vpop.permute.xlu0 %2311
        %2313 = vrot.lane.b32.xlu0 %v1985, 32
        %v2314 = vpop.permute.xlu0 %2313
        %2323 = vmatprep.subr.bf16.mxu0 0
        %2324 = vmatpush1.bf16.msra.mxu0 %v2300
        %2325 = vmatprep.subr.bf16.mxu0 0
        %2326 = vmatpush1.bf16.msra.mxu0 %v2302
        %2327 = vmatprep.subr.bf16.mxu0 0
        %2328 = vmatpush1.bf16.msra.mxu0 %v2304
        %2329 = vmatprep.subr.bf16.mxu0 0
        %2330 = vmatpush1.bf16.msra.mxu0 %v2306
        %2331 = vmatprep.subr.bf16.mxu0 0
        %2332 = vmatpush1.bf16.msra.mxu0 %v2308
        %2333 = vmatprep.subr.bf16.mxu0 0
        %2334 = vmatpush1.bf16.msra.mxu0 %v2310
        %2335 = vmatprep.subr.bf16.mxu0 0
        %2336 = vmatpush1.bf16.msra.mxu0 %v2312
        %2337 = vmatprep.subr.bf16.mxu0 0
        %2338 = vmatpush1.bf16.msra.mxu0 %v2314
        %2339 = vmatprep.subr.bf16.mxu0 0
        %2340 = vmatpush1.bf16.msra.mxu0 0
        %2341 = vmatprep.subr.bf16.mxu0 0
        %2342 = vmatpush1.bf16.msra.mxu0 0
        %2343 = vmatprep.subr.bf16.mxu0 0
        %2344 = vmatpush1.bf16.msra.mxu0 0
        %2345 = vmatprep.subr.bf16.mxu0 0
        %2346 = vmatpush1.bf16.msra.mxu0 0
        %2347 = vmatprep.subr.bf16.mxu0 0
        %2348 = vmatpush1.bf16.msra.mxu0 0
        %2349 = vmatprep.subr.bf16.mxu0 0
        %2350 = vmatpush1.bf16.msra.mxu0 0
        %2351 = vmatprep.subr.bf16.mxu0 0
        %2352 = vmatpush1.bf16.msra.mxu0 0
        %2353 = vmatprep.subr.bf16.mxu0 0
        %2354 = vmatpush1.bf16.msra.mxu0 0
        %2355 = vmatprep.mubr.bf16.mxu0 0
        %2356 = vmatmul.mubr.bf16.gmra.mrb[0].mxu0 %v2283
        %v2357 = vpop.f32.mrb[0].mxu0
        %v2358 = vadd.f32 0.0, %v2357
        %v2359 = vpop.f32.mrb[0].mxu0
        %v2360 = vpop.f32.mrb[0].mxu0
        %v2361 = vadd.f32 0.0, %v2360
        %v2362 = vpop.f32.mrb[0].mxu0
        %2363 = vmatprep.mubr.bf16.mxu0 0
        %2364 = vmatmul.mubr.bf16.gmra.mrb[0].mxu0 %v2284
        %v2365 = vpop.f32.mrb[0].mxu0
        %v2366 = vadd.f32 0.0, %v2365
        %v2367 = vpop.f32.mrb[0].mxu0
        %v2368 = vpop.f32.mrb[0].mxu0
        %v2369 = vadd.f32 0.0, %v2368
        %v2370 = vpop.f32.mrb[0].mxu0
        %2371 = vmatprep.mubr.bf16.mxu0 0
        %2372 = vmatmul.mubr.bf16.gmra.mrb[0].mxu0 %v2285
        %v2373 = vpop.f32.mrb[0].mxu0
        %v2374 = vadd.f32 0.0, %v2373
        %v2375 = vpop.f32.mrb[0].mxu0
        %v2376 = vpop.f32.mrb[0].mxu0
        %v2377 = vadd.f32 0.0, %v2376
        %v2378 = vpop.f32.mrb[0].mxu0
        %2379 = vmatprep.mubr.bf16.mxu0 0
        %2380 = vmatmul.mubr.bf16.gmra.mrb[0].mxu0 %v2286
        %v2381 = vpop.f32.mrb[0].mxu0
        %v2382 = vadd.f32 0.0, %v2381
        %v2383 = vpop.f32.mrb[0].mxu0
        %v2384 = vpop.f32.mrb[0].mxu0
        %v2385 = vadd.f32 0.0, %v2384
        %v2386 = vpop.f32.mrb[0].mxu0
        %2387 = vmatprep.mubr.bf16.mxu0 0
        %2388 = vmatmul.mubr.bf16.gmra.mrb[0].mxu0 %v2287
        %v2389 = vpop.f32.mrb[0].mxu0
        %v2390 = vadd.f32 0.0, %v2389
        %v2391 = vpop.f32.mrb[0].mxu0
        %v2392 = vpop.f32.mrb[0].mxu0
        %v2393 = vadd.f32 0.0, %v2392
        %v2394 = vpop.f32.mrb[0].mxu0
        %2395 = vmatprep.mubr.bf16.mxu0 0
        %2396 = vmatmul.mubr.bf16.gmra.mrb[0].mxu0 %v2288
        %v2397 = vpop.f32.mrb[0].mxu0
        %v2398 = vadd.f32 0.0, %v2397
        %v2399 = vpop.f32.mrb[0].mxu0
        %v2400 = vpop.f32.mrb[0].mxu0
        %v2401 = vadd.f32 0.0, %v2400
        %v2402 = vpop.f32.mrb[0].mxu0
        %2403 = vmatprep.mubr.bf16.mxu0 0
        %2404 = vmatmul.mubr.bf16.gmra.mrb[0].mxu0 %v2289
        %v2405 = vpop.f32.mrb[0].mxu0
        %v2406 = vadd.f32 0.0, %v2405
        %v2407 = vpop.f32.mrb[0].mxu0
        %v2408 = vpop.f32.mrb[0].mxu0
        %v2409 = vadd.f32 0.0, %v2408
        %v2410 = vpop.f32.mrb[0].mxu0
        %2411 = vmatprep.mubr.bf16.mxu0 0
        %2412 = vmatmul.mubr.bf16.gmra.mrb[0].mxu0 %v2290
        %v2413 = vpop.f32.mrb[0].mxu0
        %v2414 = vadd.f32 0.0, %v2413
        %v2415 = vpop.f32.mrb[0].mxu0
        %v2416 = vpop.f32.mrb[0].mxu0
        %v2417 = vadd.f32 0.0, %v2416
        %v2418 = vpop.f32.mrb[0].mxu0
        %2419 = vdwg.mxu0
        %v2420 = vrcp.pop %v2252
        %v2421 = vrcp.pop %v2254
        %v2422 = vrcp.pop %v2256
        %v2423 = vrcp.pop %v2258
        %v2424 = vrcp.pop %v2260
        %v2425 = vrcp.pop %v2262
        %v2426 = vrcp.pop %v2264
        %v2427 = vrcp.pop %v2266
        %v2428 = vrcp.pop %v2268
        %v2429 = vrcp.pop %v2270
        %v2430 = vrcp.pop %v2272
        %v2431 = vrcp.pop %v2274
        %v2432 = vrcp.pop %v2276
        %v2433 = vrcp.pop %v2278
        %v2434 = vrcp.pop %v2280
        %v2435 = vrcp.pop %v2282
        %v2436 = vmul.f32 %v2358, %v2420
        %v2437 = vmul.f32 %v2361, %v2421
        %v2438 = vmul.f32 %v2366, %v2422
        %v2439 = vmul.f32 %v2369, %v2423
        %v2440 = vmul.f32 %v2374, %v2424
        %v2441 = vmul.f32 %v2377, %v2425
        %v2442 = vmul.f32 %v2382, %v2426
        %v2443 = vmul.f32 %v2385, %v2427
        %v2444 = vmul.f32 %v2390, %v2428
        %v2445 = vmul.f32 %v2393, %v2429
        %v2446 = vmul.f32 %v2398, %v2430
        %v2447 = vmul.f32 %v2401, %v2431
        %v2448 = vmul.f32 %v2406, %v2432
        %v2449 = vmul.f32 %v2409, %v2433
        %v2450 = vmul.f32 %v2414, %v2434
        %v2451 = vmul.f32 %v2417, %v2435
        %2468 = vrot.lane.b32.xlu0 %v2436, 96
        %v2469 = vpop.permute.xlu0 %2468
        %2470 = vrot.lane.b32.xlu0 %v2437, 96
        %v2471 = vpop.permute.xlu0 %2470
        %2472 = vrot.lane.b32.xlu0 %v2438, 96
        %v2473 = vpop.permute.xlu0 %2472
        %2474 = vrot.lane.b32.xlu0 %v2439, 96
        %v2475 = vpop.permute.xlu0 %2474
        %2476 = vrot.lane.b32.xlu0 %v2440, 96
        %v2477 = vpop.permute.xlu0 %2476
        %2478 = vrot.lane.b32.xlu0 %v2441, 96
        %v2479 = vpop.permute.xlu0 %2478
        %2480 = vrot.lane.b32.xlu0 %v2442, 96
        %v2481 = vpop.permute.xlu0 %2480
        %2482 = vrot.lane.b32.xlu0 %v2443, 96
        %v2483 = vpop.permute.xlu0 %2482
        %2484 = vrot.lane.b32.xlu0 %v2444, 96
        %v2485 = vpop.permute.xlu0 %2484
        %2486 = vrot.lane.b32.xlu0 %v2445, 96
        %v2487 = vpop.permute.xlu0 %2486
        %2488 = vrot.lane.b32.xlu0 %v2446, 96
        %v2489 = vpop.permute.xlu0 %2488
        %2490 = vrot.lane.b32.xlu0 %v2447, 96
        %v2491 = vpop.permute.xlu0 %2490
        %2492 = vrot.lane.b32.xlu0 %v2448, 96
        %v2493 = vpop.permute.xlu0 %2492
        %2494 = vrot.lane.b32.xlu0 %v2449, 96
        %v2495 = vpop.permute.xlu0 %2494
        %2496 = vrot.lane.b32.xlu0 %v2450, 96
        %v2497 = vpop.permute.xlu0 %2496
        %2498 = vrot.lane.b32.xlu0 %v2451, 96
        %v2499 = vpop.permute.xlu0 %2498
        %vm2516 = vcmask 1048320
        %2517 = vst.msk [vmem:[%s218] sm:$0xff] %vm2516, %v2469
        %2518 = vst.msk [vmem:[%s218 + $0x8] sm:$0xff] %vm2516, %v2471
        %2519 = vst.msk [vmem:[%s218 + $0x10] sm:$0xff] %vm2516, %v2473
        %2520 = vst.msk [vmem:[%s218 + $0x18] sm:$0xff] %vm2516, %v2475
        %2521 = vst.msk [vmem:[%s218 + $0x20] sm:$0xff] %vm2516, %v2477
        %2522 = vst.msk [vmem:[%s218 + $0x28] sm:$0xff] %vm2516, %v2479
        %2523 = vst.msk [vmem:[%s218 + $0x30] sm:$0xff] %vm2516, %v2481
        %2524 = vst.msk [vmem:[%s218 + $0x38] sm:$0xff] %vm2516, %v2483
        %2525 = vst.msk [vmem:[%s218 + $0x40] sm:$0xff] %vm2516, %v2485
        %2526 = vst.msk [vmem:[%s218 + $0x48] sm:$0xff] %vm2516, %v2487
        %2527 = vst.msk [vmem:[%s218 + $0x50] sm:$0xff] %vm2516, %v2489
        %2528 = vst.msk [vmem:[%s218 + $0x58] sm:$0xff] %vm2516, %v2491
        %2529 = vst.msk [vmem:[%s218 + $0x60] sm:$0xff] %vm2516, %v2493
        %2530 = vst.msk [vmem:[%s218 + $0x68] sm:$0xff] %vm2516, %v2495
        %2531 = vst.msk [vmem:[%s218 + $0x70] sm:$0xff] %vm2516, %v2497
        %2532 = vst.msk [vmem:[%s218 + $0x78] sm:$0xff] %vm2516, %v2499
        %s2533 = sand.u32 %s119, 1
        %s2534 = scalar_lea.sflag [#allocation3], %s2533
        %s2535 = sand.u32 %s119, 1
        %s2536 = smul.addr %s2535, 128
        %s2537 = scalar_lea.vmem [#allocation2], %s2536
        // Predicated region
        $region33: #{minimal_a2a_attn_op.1} parent=31 // pred_check
          %p2538 = pneg %p129
        $region34: #{minimal_a2a_attn_op.1} parent=31 // pred_check_branch
          %2540 = sbr.rel (%p2538) target = $region36
        $region35: #{minimal_a2a_attn_op.1} parent=31 // pred_region
          %s2541 = smul.u32 16, %s22
          %s2543 = ssub.s32 2048, 2048
          %2544 = vsyncadd %s2534, %s2543
          %s2545 = smul.addr %s21, 16
          %s2546 = sadd.s32 %s2541, %s2545
          %s2547 = smul.addr %s2546, 128
          %s2548 = scalar_lea.hbm %s3, %s2547
          %s2549 = sshll.u32 %s2537, 4
          %s2550 = int_to_ptr.vmem [resolvable:$true] %s2549
          %2555 = dma.vmem_to_hbm [thread:$0]  %s2550, 2048, %s2548, %s2534, 128, 128, 8
        $region36: #{minimal_a2a_attn_op.1} parent=31 // pred_fallthru
          _
      $region32: #{minimal_a2a_attn_op.1} parent=5 // pred_fallthru
        _
      %p2556 = scmp.le.s32.totalorder 2, %s12
      // Predicated region
      $region37: #{minimal_a2a_attn_op.1} parent=5 // pred_check
        %p2557 = pneg %p2556
      $region38: #{minimal_a2a_attn_op.1} parent=5 // pred_check_branch
        %2559 = sbr.rel (%p2557) target = $region40
      $region39: #{minimal_a2a_attn_op.1} parent=5 // pred_region
        %s2560 = ssub.s32 %s12, 2
        // Predicated region
        $region41: #{minimal_a2a_attn_op.1} parent=39 // pred_check
          %p2561 = pneg %p135
        $region42: #{minimal_a2a_attn_op.1} parent=39 // pred_check_branch
          %2563 = sbr.rel (%p2561) target = $region44
        $region43: #{minimal_a2a_attn_op.1} parent=39 // pred_region
          %s2564 = sand.u32 %s120, 1
          %s2565 = scalar_lea.sflag [#allocation3], %s2564
          %s2566 = sand.u32 %s120, 1
          %s2567 = smul.addr %s2566, 128
          %s2568 = scalar_lea.vmem [#allocation2], %s2567
          %2569 = dma.done %s2565, 2048
        $region44: #{minimal_a2a_attn_op.1} parent=39 // pred_fallthru
          _
      $region40: #{minimal_a2a_attn_op.1} parent=5 // pred_fallthru
        _
    $region6: #{minimal_a2a_attn_op.1} parent=1 // loop_footer
      %s16 = sadd.s32 1, %s12
    $region7: #{minimal_a2a_attn_op.1} parent=1 // loop_footer_branch
      %11 = sbr.rel target = $region3
    $region8: #{minimal_a2a_attn_op.1} parent=1 // loop_exit
      _
    %2570 = vsyncpa [#allocation3], 1
    %s2571 = scalar_lea.sflag [#allocation3], 1
    %2572 = vsyncpa %s2571, 1

</llo_original>
